<compile_context>
chip_gen: v6e
topology: v6e:2x2x1
jax: 0.10.0
libtpu: 0.0.40
codegen_flags: <defaults>
</compile_context>

<pallas_src>
import math
import functools

import jax
import jax.numpy as jnp
from jax import lax
from jax.experimental import pallas as pl
from jax.experimental.pallas import tpu as pltpu


# ---------------------------------------------------------------------------
# In-kernel helpers (traced inside the Pallas kernel body)
# ---------------------------------------------------------------------------
def _layernorm(x, gamma, beta, eps=1e-12):
    # PyTorch nn.LayerNorm: biased variance over the last axis, eps inside sqrt.
    mean = jnp.mean(x, axis=-1, keepdims=True)
    var = jnp.mean((x - mean) ** 2, axis=-1, keepdims=True)
    return (x - mean) * lax.rsqrt(var + eps) * gamma + beta


def _gelu_erf(x):
    # Exact erf-based GELU (matches F.gelu default / _gelu_python).
    return x * 0.5 * (1.0 + lax.erf(x * (1.0 / math.sqrt(2.0))))


# ---------------------------------------------------------------------------
# Pallas kernel: one (batch, query-tile, intermediate-chunk) grid step
# ---------------------------------------------------------------------------
def bert_layer_kernel(num_heads,
                      x_full_ref, x_tile_ref,
                      wqkv_ref, bqkv_ref,
                      wo_ref, bo_ref, g1_ref, b1_ref,
                      wi_ref, bi_ref, wo2_ref, bo2_ref, g2_ref, b2_ref,
                      out_ref,
                      attn_sc, ffn_acc):
    ik = pl.program_id(2)
    n_ik = pl.num_programs(2)

    S = x_full_ref.shape[1]
    TQ = x_tile_ref.shape[1]
    H = x_full_ref.shape[-1]
    hd = H // num_heads
    scale = 1.0 / math.sqrt(hd)
    f32 = jnp.float32
    bf16 = jnp.bfloat16

    # --- attention + BertSelfOutput: only on the first intermediate chunk ---
    @pl.when(ik == 0)
    def _attention():
        xf = x_full_ref[0]              # (S, H)   source for keys / values
        xt = x_tile_ref[0]              # (TQ, H)  queries + residual rows

        if TQ == S:
            # single fused QKV matmul: one MXU push with lane-dense N = 3H
            qkv = jnp.dot(xt.astype(bf16), wqkv_ref[...],
                          preferred_element_type=f32) + bqkv_ref[...]
            q = qkv[:, :H]
            k = qkv[:, H:2 * H]
            v = qkv[:, 2 * H:]
        else:
            # query tile < sequence: Q from tile rows, fused K/V from full slab.
            # (K/V are recomputed per query tile; for very long sequences a
            #  separate K/V pre-pass would remove that redundancy.)
            q = jnp.dot(xt.astype(bf16), wqkv_ref[:, :H],
                        preferred_element_type=f32) + bqkv_ref[:, :H]
            kv = jnp.dot(xf.astype(bf16), wqkv_ref[:, H:],
                         preferred_element_type=f32) + bqkv_ref[:, H:]
            k = kv[:, :H]
            v = kv[:, H:]

        # heads batched through dot_general with a leading batch dim
        # (no per-head python loop, no kh.T, scale folded into Q once)
        q3 = jnp.transpose((q * scale).reshape(TQ, num_heads, hd), (1, 0, 2)).astype(bf16)
        k3 = jnp.transpose(k.reshape(S, num_heads, hd), (1, 0, 2)).astype(bf16)
        v3 = jnp.transpose(v.reshape(S, num_heads, hd), (1, 0, 2)).astype(bf16)

        scores = jnp.einsum('hqd,hkd->hqk', q3, k3,
                            preferred_element_type=f32)          # (nh, TQ, S)
        scores = scores - jnp.max(scores, axis=-1, keepdims=True)
        e = jnp.exp(scores)
        probs = e * pl.reciprocal(jnp.sum(e, axis=-1, keepdims=True), approx=True)

        ctx = jnp.einsum('hqk,hkd->hqd', probs.astype(bf16), v3,
                         preferred_element_type=f32)              # (nh, TQ, hd)
        ctx = jnp.transpose(ctx, (1, 0, 2)).reshape(TQ, H)

        # BertSelfOutput: dense + residual + LayerNorm (f32)
        attn_in = jnp.dot(ctx.astype(bf16), wo_ref[...],
                          preferred_element_type=f32) + bo_ref[...]
        attn_sc[...] = _layernorm(attn_in + xt, g1_ref[...], b1_ref[...])
        ffn_acc[...] = jnp.zeros_like(ffn_acc)

    # --- FFN chunk over the intermediate dim (streamed wi / wo2 blocks) ---
    attn = attn_sc[...]
    h_blk = jnp.dot(attn.astype(bf16), wi_ref[...],
                    preferred_element_type=f32) + bi_ref[...]     # (TQ, TI)
    h_blk = _gelu_erf(h_blk)
    ffn_acc[...] += jnp.dot(h_blk.astype(bf16), wo2_ref[...],
                            preferred_element_type=f32)           # (TQ, H)

    # --- BertOutput epilogue: bias + residual + LayerNorm on last chunk ---
    @pl.when(ik == n_ik - 1)
    def _finish():
        out = _layernorm(ffn_acc[...] + bo2_ref[...] + attn_sc[...],
                         g2_ref[...], b2_ref[...])
        out_ref[0] = out.astype(out_ref.dtype)


# ---------------------------------------------------------------------------
# Wrapper
# ---------------------------------------------------------------------------
def _choose_tile(full, cap, align):
    """Largest divisor of `full` that is <= cap and `align`-aligned, else full."""
    if full <= cap:
        return full
    t = (cap // align) * align
    while t >= align:
        if full % t == 0:
            return t
        t -= align
    return full


def bert_layer_forward(x, params, num_heads, *, q_tile=None, i_tile=None):
    B, S, H = x.shape
    I = params["wi"].shape[1]
    assert H % num_heads == 0, "hidden size must be divisible by num_heads"

    if q_tile is None:
        q_tile = _choose_tile(S, 512, 8)     # query-tile rows per grid step
    if i_tile is None:
        i_tile = _choose_tile(I, 512, 128)   # intermediate-dim chunk per grid step
    assert S % q_tile == 0 and (q_tile % 8 == 0 or q_tile == S)
    assert I % i_tile == 0 and (i_tile % 128 == 0 or i_tile == I)
    n_q, n_i = S // q_tile, I // i_tile

    f32, bf16 = jnp.float32, jnp.bfloat16

    # fuse Q/K/V into one (H, 3H) weight; MXU operands stored in bf16 (f32 acc in-kernel)
    wqkv = jnp.concatenate([params["wq"], params["wk"], params["wv"]], axis=1).astype(bf16)
    bqkv = jnp.concatenate([params["bq"], params["bk"], params["bv"]], axis=1).astype(f32)
    wo = params["wo"].astype(bf16)
    wi = params["wi"].astype(bf16)
    wo2 = params["wo2"].astype(bf16)

    rep2d = lambda shape: pl.BlockSpec(shape, lambda b, qi, ik: (0, 0))

    in_specs = [
        pl.BlockSpec((1, S, H), lambda b, qi, ik: (b, 0, 0)),        # x: full seq (K/V)
        pl.BlockSpec((1, q_tile, H), lambda b, qi, ik: (b, qi, 0)),  # x: query tile
        rep2d((H, 3 * H)), rep2d((1, 3 * H)),                        # fused QKV W, b
        rep2d((H, H)), rep2d((1, H)),                                # attn out dense W, b
        rep2d((1, H)), rep2d((1, H)),                                # LayerNorm1 gamma, beta
        pl.BlockSpec((H, i_tile), lambda b, qi, ik: (0, ik)),        # wi chunk   (streamed)
        pl.BlockSpec((1, i_tile), lambda b, qi, ik: (0, ik)),        # bi chunk   (streamed)
        pl.BlockSpec((i_tile, H), lambda b, qi, ik: (ik, 0)),        # wo2 chunk  (streamed)
        rep2d((1, H)),                                               # bo2
        rep2d((1, H)), rep2d((1, H)),                                # LayerNorm2 gamma, beta
    ]
    out_specs = pl.BlockSpec((1, q_tile, H), lambda b, qi, ik: (b, qi, 0))

    return pl.pallas_call(
        functools.partial(bert_layer_kernel, num_heads),
        out_shape=jax.ShapeDtypeStruct((B, S, H), x.dtype),
        grid_spec=pltpu.PrefetchScalarGridSpec(
            num_scalar_prefetch=0,
            grid=(B, n_q, n_i),
            in_specs=in_specs,
            out_specs=out_specs,
            scratch_shapes=[pltpu.VMEM((q_tile, H), f32),    # attention output (post-LN1)
                            pltpu.VMEM((q_tile, H), f32)],   # FFN f32 accumulator
        ),
        compiler_params=pltpu.CompilerParams(
            dimension_semantics=("parallel", "parallel", "arbitrary"),
            vmem_limit_bytes=48 * 1024 * 1024),
    )(x, x,
      wqkv, bqkv,
      wo, params["bo"].astype(f32), params["g1"].astype(f32), params["b1"].astype(f32),
      wi, params["bi"].astype(f32), wo2, params["bo2"].astype(f32),
      params["g2"].astype(f32), params["b2"].astype(f32))


# ---------------------------------------------------------------------------
# Pure-JAX fp32 reference (same math, no Pallas) for a self-check
# ---------------------------------------------------------------------------
def bert_layer_reference(x, p, num_heads):
    B, S, H = x.shape
    hd = H // num_heads

    def ln(y, g, b):
        m = jnp.mean(y, axis=-1, keepdims=True)
        v = jnp.mean((y - m) ** 2, axis=-1, keepdims=True)
        return (y - m) / jnp.sqrt(v + 1e-12) * g + b

    q = x @ p["wq"] + p["bq"]
    k = x @ p["wk"] + p["bk"]
    v = x @ p["wv"] + p["bv"]

    def split(t):  # (B,S,H) -> (B,nh,S,hd)
        return t.reshape(B, S, num_heads, hd).transpose(0, 2, 1, 3)

    qh, kh, vh = split(q), split(k), split(v)
    scores = jnp.einsum("bhqd,bhkd->bhqk", qh, kh) / math.sqrt(hd)
    probs = jax.nn.softmax(scores, axis=-1)
    ctx = jnp.einsum("bhqk,bhkd->bhqd", probs, vh)
    ctx = ctx.transpose(0, 2, 1, 3).reshape(B, S, H)

    attn = ln(ctx @ p["wo"] + p["bo"] + x, p["g1"], p["b1"])
    inter = attn @ p["wi"] + p["bi"]
    inter = inter * 0.5 * (1.0 + jax.lax.erf(inter / math.sqrt(2.0)))
    out = ln(inter @ p["wo2"] + p["bo2"] + attn, p["g2"], p["b2"])
    return out


# ---------------------------------------------------------------------------
# Main
# ---------------------------------------------------------------------------
if __name__ == "__main__":
    B, S, H, I = 2, 16, 32, 64
    num_heads = 4

    key = jax.random.PRNGKey(0)
    keys = jax.random.split(key, 16)
    dt = jnp.float32

    def w(k, shape, scale=0.05):
        return (scale * jax.random.normal(k, shape)).astype(dt)

    params = {
        "wq": w(keys[0], (H, H)), "bq": w(keys[1], (1, H)),
        "wk": w(keys[2], (H, H)), "bk": w(keys[3], (1, H)),
        "wv": w(keys[4], (H, H)), "bv": w(keys[5], (1, H)),
        "wo": w(keys[6], (H, H)), "bo": w(keys[7], (1, H)),
        "g1": jnp.ones((1, H), dt), "b1": jnp.zeros((1, H), dt),
        "wi": w(keys[8], (H, I)), "bi": w(keys[9], (1, I)),
        "wo2": w(keys[10], (I, H)), "bo2": w(keys[11], (1, H)),
        "g2": jnp.ones((1, H), dt), "b2": jnp.zeros((1, H), dt),
    }

    x = jax.random.normal(keys[12], (B, S, H)).astype(dt)
    ref = bert_layer_reference(x, params, num_heads)

    # Path 1: query tile == full sequence (single fused QKV matmul).
    out = jax.block_until_ready(bert_layer_forward(x, params, num_heads))
    assert out.shape == (B, S, H)
    # bf16 MXU operands + approx reciprocal -> looser tolerance than pure fp32.
    assert jnp.allclose(out, ref, atol=2e-2, rtol=2e-2), "mismatch vs reference (fused path)"

    # Path 2: sequence-tiled queries (exercises the parallel S-tile grid axis).
    out_tiled = jax.block_until_ready(bert_layer_forward(x, params, num_heads, q_tile=8))
    assert jnp.allclose(out_tiled, ref, atol=2e-2, rtol=2e-2), "mismatch vs reference (tiled path)"

    print("KERNEL_OK")
</pallas_src>

<mosaic_0001>
module attributes {stable_mosaic.version = 11 : i64} {
  func.func @bert_layer_kernel(%arg0: i32, %arg1: i32, %arg2: i32, %arg3: memref<1x16x32xf32, #tpu.memory_space<vmem>>, %arg4: memref<1x16x32xf32, #tpu.memory_space<vmem>>, %arg5: memref<32x96xbf16, #tpu.memory_space<vmem>>, %arg6: memref<1x96xf32, #tpu.memory_space<vmem>>, %arg7: memref<32x32xbf16, #tpu.memory_space<vmem>>, %arg8: memref<1x32xf32, #tpu.memory_space<vmem>>, %arg9: memref<1x32xf32, #tpu.memory_space<vmem>>, %arg10: memref<1x32xf32, #tpu.memory_space<vmem>>, %arg11: memref<32x64xbf16, #tpu.memory_space<vmem>>, %arg12: memref<1x64xf32, #tpu.memory_space<vmem>>, %arg13: memref<64x32xbf16, #tpu.memory_space<vmem>>, %arg14: memref<1x32xf32, #tpu.memory_space<vmem>>, %arg15: memref<1x32xf32, #tpu.memory_space<vmem>>, %arg16: memref<1x32xf32, #tpu.memory_space<vmem>>, %arg17: memref<1x16x32xf32, #tpu.memory_space<vmem>>, %arg18: memref<16x32xf32, #tpu.memory_space<vmem>>, %arg19: memref<16x32xf32, #tpu.memory_space<vmem>>) attributes {dimension_semantics = [#tpu.dimension_semantics<parallel>, #tpu.dimension_semantics<parallel>, #tpu.dimension_semantics<arbitrary>], iteration_bounds = array<i64: 2, 1, 1>, scalar_prefetch = 0 : i64, scratch_operands = 2 : i64, tpu.core_type = #tpu.core_type<tc>, window_params = [{transform_indices = @transform_0, window_bounds = array<i64: 1, 16, 32>}, {transform_indices = @transform_1, window_bounds = array<i64: 1, 16, 32>}, {pipeline_mode = #tpu.pipeline_mode<synchronous>, transform_indices = @transform_2, window_bounds = array<i64: 32, 96>}, {pipeline_mode = #tpu.pipeline_mode<synchronous>, transform_indices = @transform_3, window_bounds = array<i64: 1, 96>}, {pipeline_mode = #tpu.pipeline_mode<synchronous>, transform_indices = @transform_4, window_bounds = array<i64: 32, 32>}, {pipeline_mode = #tpu.pipeline_mode<synchronous>, transform_indices = @transform_5, window_bounds = array<i64: 1, 32>}, {pipeline_mode = #tpu.pipeline_mode<synchronous>, transform_indices = @transform_6, window_bounds = array<i64: 1, 32>}, {pipeline_mode = #tpu.pipeline_mode<synchronous>, transform_indices = @transform_7, window_bounds = array<i64: 1, 32>}, {transform_indices = @transform_8, window_bounds = array<i64: 32, 64>}, {transform_indices = @transform_9, window_bounds = array<i64: 1, 64>}, {transform_indices = @transform_10, window_bounds = array<i64: 64, 32>}, {pipeline_mode = #tpu.pipeline_mode<synchronous>, transform_indices = @transform_11, window_bounds = array<i64: 1, 32>}, {pipeline_mode = #tpu.pipeline_mode<synchronous>, transform_indices = @transform_12, window_bounds = array<i64: 1, 32>}, {pipeline_mode = #tpu.pipeline_mode<synchronous>, transform_indices = @transform_13, window_bounds = array<i64: 1, 32>}, {transform_indices = @transform_14, window_bounds = array<i64: 1, 16, 32>}]} {
    %c0_i32 = arith.constant 0 : i32
    %0 = arith.cmpi eq, %arg2, %c0_i32 : i32
    %1 = arith.extui %0 : i1 to i32
    %c0_i32_0 = arith.constant 0 : i32
    %2 = arith.cmpi ne, %1, %c0_i32_0 : i32
    scf.if %2 {
      %c0_18 = arith.constant 0 : index
      %c0_19 = arith.constant 0 : index
      %c0_20 = arith.constant 0 : index
      %27 = vector.load %arg4[%c0_18, %c0_19, %c0_20] : memref<1x16x32xf32, #tpu.memory_space<vmem>>, vector<1x16x32xf32>
      %28 = vector.shape_cast %27 : vector<1x16x32xf32> to vector<16x32xf32>
      %29 = arith.truncf %28 : vector<16x32xf32> to vector<16x32xbf16>
      %c0_21 = arith.constant 0 : index
      %c0_22 = arith.constant 0 : index
      %30 = vector.load %arg5[%c0_21, %c0_22] : memref<32x96xbf16, #tpu.memory_space<vmem>>, vector<32x96xbf16>
      %cst_23 = arith.constant dense<0.000000e+00> : vector<16x96xf32>
      %31 = tpu.matmul %29, %30, %cst_23 {dimension_numbers = #tpu.dot_dimension_numbers<[1], [0], [0], [1], [0, 0, 1, 1], [], []>} : vector<16x32xbf16>, vector<32x96xbf16>, vector<16x96xf32> -> vector<16x96xf32>
      %c0_24 = arith.constant 0 : index
      %c0_25 = arith.constant 0 : index
      %32 = vector.load %arg6[%c0_24, %c0_25] : memref<1x96xf32, #tpu.memory_space<vmem>>, vector<1x96xf32>
      %33 = vector.broadcast %32 : vector<1x96xf32> to vector<16x96xf32>
      %34 = arith.addf %31, %33 : vector<16x96xf32>
      %35 = vector.extract_strided_slice %34 {offsets = [0, 0], sizes = [16, 32], strides = [1, 1]} : vector<16x96xf32> to vector<16x32xf32>
      %36 = vector.extract_strided_slice %34 {offsets = [0, 32], sizes = [16, 32], strides = [1, 1]} : vector<16x96xf32> to vector<16x32xf32>
      %37 = vector.extract_strided_slice %34 {offsets = [0, 64], sizes = [16, 32], strides = [1, 1]} : vector<16x96xf32> to vector<16x32xf32>
      %cst_26 = arith.constant 0.353553385 : f32
      %38 = vector.broadcast %cst_26 : f32 to vector<16x32xf32>
      %39 = arith.mulf %35, %38 : vector<16x32xf32>
      %40 = vector.shape_cast %39 : vector<16x32xf32> to vector<16x4x8xf32>
      %41 = tpu.transpose %40, [1, 0, 2] : vector<16x4x8xf32> -> vector<4x16x8xf32>
      %42 = arith.truncf %41 : vector<4x16x8xf32> to vector<4x16x8xbf16>
      %43 = vector.shape_cast %36 : vector<16x32xf32> to vector<16x4x8xf32>
      %44 = tpu.transpose %43, [1, 0, 2] : vector<16x4x8xf32> -> vector<4x16x8xf32>
      %45 = arith.truncf %44 : vector<4x16x8xf32> to vector<4x16x8xbf16>
      %46 = vector.shape_cast %37 : vector<16x32xf32> to vector<16x4x8xf32>
      %47 = tpu.transpose %46, [1, 0, 2] : vector<16x4x8xf32> -> vector<4x16x8xf32>
      %48 = arith.truncf %47 : vector<4x16x8xf32> to vector<4x16x8xbf16>
      "tpu.trace_start"() <{level = 10 : i32, message = "hqd,hkd->hqk"}> : () -> ()
      %cst_27 = arith.constant dense<0.000000e+00> : vector<4x16x16xf32>
      %49 = tpu.matmul %42, %45, %cst_27 {dimension_numbers = #tpu.dot_dimension_numbers<[2], [2], [1], [1], [0, 0, 0, 1, 1, 1], [0], [0]>} : vector<4x16x8xbf16>, vector<4x16x8xbf16>, vector<4x16x16xf32> -> vector<4x16x16xf32>
      "tpu.trace_stop"() : () -> ()
      %cst_28 = arith.constant dense<0xFF800000> : vector<4x16xf32>
      %50 = vector.multi_reduction <maximumf>, %49, %cst_28 [2] : vector<4x16x16xf32> to vector<4x16xf32>
      %51 = vector.shape_cast %50 : vector<4x16xf32> to vector<4x16x1xf32>
      %52 = vector.broadcast %51 : vector<4x16x1xf32> to vector<4x16x16xf32>
      %53 = arith.subf %49, %52 : vector<4x16x16xf32>
      %54 = math.exp %53 : vector<4x16x16xf32>
      %cst_29 = arith.constant dense<0.000000e+00> : vector<4x16xf32>
      %55 = vector.multi_reduction <add>, %54, %cst_29 [2] : vector<4x16x16xf32> to vector<4x16xf32>
      %56 = vector.shape_cast %55 : vector<4x16xf32> to vector<4x16x1xf32>
      %57 = tpu.reciprocal %56 {approx = true} : vector<4x16x1xf32> -> vector<4x16x1xf32>
      %58 = vector.broadcast %57 : vector<4x16x1xf32> to vector<4x16x16xf32>
      %59 = arith.mulf %54, %58 : vector<4x16x16xf32>
      %60 = arith.truncf %59 : vector<4x16x16xf32> to vector<4x16x16xbf16>
      "tpu.trace_start"() <{level = 10 : i32, message = "hqk,hkd->hqd"}> : () -> ()
      %cst_30 = arith.constant dense<0.000000e+00> : vector<4x16x8xf32>
      %61 = tpu.matmul %60, %48, %cst_30 {dimension_numbers = #tpu.dot_dimension_numbers<[2], [1], [1], [2], [0, 0, 0, 1, 1, 2], [0], [0]>} : vector<4x16x16xbf16>, vector<4x16x8xbf16>, vector<4x16x8xf32> -> vector<4x16x8xf32>
      "tpu.trace_stop"() : () -> ()
      %62 = tpu.transpose %61, [1, 0, 2] : vector<4x16x8xf32> -> vector<16x4x8xf32>
      %63 = vector.shape_cast %62 : vector<16x4x8xf32> to vector<16x32xf32>
      %64 = arith.truncf %63 : vector<16x32xf32> to vector<16x32xbf16>
      %c0_31 = arith.constant 0 : index
      %c0_32 = arith.constant 0 : index
      %65 = vector.load %arg7[%c0_31, %c0_32] : memref<32x32xbf16, #tpu.memory_space<vmem>>, vector<32x32xbf16>
      %cst_33 = arith.constant dense<0.000000e+00> : vector<16x32xf32>
      %66 = tpu.matmul %64, %65, %cst_33 {dimension_numbers = #tpu.dot_dimension_numbers<[1], [0], [0], [1], [0, 0, 1, 1], [], []>} : vector<16x32xbf16>, vector<32x32xbf16>, vector<16x32xf32> -> vector<16x32xf32>
      %c0_34 = arith.constant 0 : index
      %c0_35 = arith.constant 0 : index
      %67 = vector.load %arg8[%c0_34, %c0_35] : memref<1x32xf32, #tpu.memory_space<vmem>>, vector<1x32xf32>
      %68 = vector.broadcast %67 : vector<1x32xf32> to vector<16x32xf32>
      %69 = arith.addf %66, %68 : vector<16x32xf32>
      %70 = arith.addf %69, %28 : vector<16x32xf32>
      %c0_36 = arith.constant 0 : index
      %c0_37 = arith.constant 0 : index
      %71 = vector.load %arg9[%c0_36, %c0_37] : memref<1x32xf32, #tpu.memory_space<vmem>>, vector<1x32xf32>
      %c0_38 = arith.constant 0 : index
      %c0_39 = arith.constant 0 : index
      %72 = vector.load %arg10[%c0_38, %c0_39] : memref<1x32xf32, #tpu.memory_space<vmem>>, vector<1x32xf32>
      %cst_40 = arith.constant dense<0.000000e+00> : vector<16xf32>
      %73 = vector.multi_reduction <add>, %70, %cst_40 [1] : vector<16x32xf32> to vector<16xf32>
      %74 = vector.shape_cast %73 : vector<16xf32> to vector<16x1xf32>
      %cst_41 = arith.constant 3.200000e+01 : f32
      %75 = vector.broadcast %cst_41 : f32 to vector<16x1xf32>
      %76 = arith.divf %74, %75 : vector<16x1xf32>
      %77 = vector.broadcast %76 : vector<16x1xf32> to vector<16x32xf32>
      %78 = arith.subf %70, %77 : vector<16x32xf32>
      %79 = arith.mulf %78, %78 : vector<16x32xf32>
      %cst_42 = arith.constant dense<0.000000e+00> : vector<16xf32>
      %80 = vector.multi_reduction <add>, %79, %cst_42 [1] : vector<16x32xf32> to vector<16xf32>
      %81 = vector.shape_cast %80 : vector<16xf32> to vector<16x1xf32>
      %cst_43 = arith.constant 3.200000e+01 : f32
      %82 = vector.broadcast %cst_43 : f32 to vector<16x1xf32>
      %83 = arith.divf %81, %82 : vector<16x1xf32>
      %84 = vector.broadcast %76 : vector<16x1xf32> to vector<16x32xf32>
      %85 = arith.subf %70, %84 : vector<16x32xf32>
      %cst_44 = arith.constant 9.99999996E-13 : f32
      %86 = vector.broadcast %cst_44 : f32 to vector<16x1xf32>
      %87 = arith.addf %83, %86 : vector<16x1xf32>
      %88 = math.rsqrt %87 : vector<16x1xf32>
      %89 = vector.broadcast %88 : vector<16x1xf32> to vector<16x32xf32>
      %90 = arith.mulf %85, %89 : vector<16x32xf32>
      %91 = vector.broadcast %71 : vector<1x32xf32> to vector<16x32xf32>
      %92 = arith.mulf %90, %91 : vector<16x32xf32>
      %93 = vector.broadcast %72 : vector<1x32xf32> to vector<16x32xf32>
      %94 = arith.addf %92, %93 : vector<16x32xf32>
      %c0_45 = arith.constant 0 : index
      %c0_46 = arith.constant 0 : index
      %95 = vector.load %arg18[%c0_45, %c0_46] : memref<16x32xf32, #tpu.memory_space<vmem>>, vector<16x32xf32>
      tpu.vector_store %arg18[%c0_45, %c0_46], %94 {strides = array<i32>} : memref<16x32xf32, #tpu.memory_space<vmem>>, vector<16x32xf32>,
      %cst_47 = arith.constant 0.000000e+00 : f32
      %96 = vector.broadcast %cst_47 : f32 to vector<16x32xf32>
      %c0_48 = arith.constant 0 : index
      %c0_49 = arith.constant 0 : index
      %97 = vector.load %arg19[%c0_48, %c0_49] : memref<16x32xf32, #tpu.memory_space<vmem>>, vector<16x32xf32>
      tpu.vector_store %arg19[%c0_48, %c0_49], %96 {strides = array<i32>} : memref<16x32xf32, #tpu.memory_space<vmem>>, vector<16x32xf32>,
    } else {
    }
    %c0 = arith.constant 0 : index
    %c0_1 = arith.constant 0 : index
    %3 = vector.load %arg18[%c0, %c0_1] : memref<16x32xf32, #tpu.memory_space<vmem>>, vector<16x32xf32>
    %4 = arith.truncf %3 : vector<16x32xf32> to vector<16x32xbf16>
    %c0_2 = arith.constant 0 : index
    %c0_3 = arith.constant 0 : index
    %5 = vector.load %arg11[%c0_2, %c0_3] : memref<32x64xbf16, #tpu.memory_space<vmem>>, vector<32x64xbf16>
    %cst = arith.constant dense<0.000000e+00> : vector<16x64xf32>
    %6 = tpu.matmul %4, %5, %cst {dimension_numbers = #tpu.dot_dimension_numbers<[1], [0], [0], [1], [0, 0, 1, 1], [], []>} : vector<16x32xbf16>, vector<32x64xbf16>, vector<16x64xf32> -> vector<16x64xf32>
    %c0_4 = arith.constant 0 : index
    %c0_5 = arith.constant 0 : index
    %7 = vector.load %arg12[%c0_4, %c0_5] : memref<1x64xf32, #tpu.memory_space<vmem>>, vector<1x64xf32>
    %8 = vector.broadcast %7 : vector<1x64xf32> to vector<16x64xf32>
    %9 = arith.addf %6, %8 : vector<16x64xf32>
    %cst_6 = arith.constant 5.000000e-01 : f32
    %10 = vector.broadcast %cst_6 : f32 to vector<16x64xf32>
    %11 = arith.mulf %9, %10 : vector<16x64xf32>
    %cst_7 = arith.constant 0.707106769 : f32
    %12 = vector.broadcast %cst_7 : f32 to vector<16x64xf32>
    %13 = arith.mulf %9, %12 : vector<16x64xf32>
    %14 = math.erf %13 : vector<16x64xf32>
    %cst_8 = arith.constant 1.000000e+00 : f32
    %15 = vector.broadcast %cst_8 : f32 to vector<16x64xf32>
    %16 = arith.addf %15, %14 : vector<16x64xf32>
    %17 = arith.mulf %11, %16 : vector<16x64xf32>
    %c0_9 = arith.constant 0 : index
    %c0_10 = arith.constant 0 : index
    %18 = vector.load %arg19[%c0_9, %c0_10] : memref<16x32xf32, #tpu.memory_space<vmem>>, vector<16x32xf32>
    %19 = arith.truncf %17 : vector<16x64xf32> to vector<16x64xbf16>
    %c0_11 = arith.constant 0 : index
    %c0_12 = arith.constant 0 : index
    %20 = vector.load %arg13[%c0_11, %c0_12] : memref<64x32xbf16, #tpu.memory_space<vmem>>, vector<64x32xbf16>
    %cst_13 = arith.constant dense<0.000000e+00> : vector<16x32xf32>
    %21 = tpu.matmul %19, %20, %cst_13 {dimension_numbers = #tpu.dot_dimension_numbers<[1], [0], [0], [1], [0, 0, 1, 1], [], []>} : vector<16x64xbf16>, vector<64x32xbf16>, vector<16x32xf32> -> vector<16x32xf32>
    %22 = arith.addf %18, %21 : vector<16x32xf32>
    %c0_14 = arith.constant 0 : index
    %c0_15 = arith.constant 0 : index
    %23 = vector.load %arg19[%c0_14, %c0_15] : memref<16x32xf32, #tpu.memory_space<vmem>>, vector<16x32xf32>
    tpu.vector_store %arg19[%c0_14, %c0_15], %22 {strides = array<i32>} : memref<16x32xf32, #tpu.memory_space<vmem>>, vector<16x32xf32>,
    %c0_i32_16 = arith.constant 0 : i32
    %24 = arith.cmpi eq, %arg2, %c0_i32_16 : i32
    %25 = arith.extui %24 : i1 to i32
    %c0_i32_17 = arith.constant 0 : i32
    %26 = arith.cmpi ne, %25, %c0_i32_17 : i32
    scf.if %26 {
      %c0_18 = arith.constant 0 : index
      %c0_19 = arith.constant 0 : index
      %27 = vector.load %arg19[%c0_18, %c0_19] : memref<16x32xf32, #tpu.memory_space<vmem>>, vector<16x32xf32>
      %c0_20 = arith.constant 0 : index
      %c0_21 = arith.constant 0 : index
      %28 = vector.load %arg14[%c0_20, %c0_21] : memref<1x32xf32, #tpu.memory_space<vmem>>, vector<1x32xf32>
      %29 = vector.broadcast %28 : vector<1x32xf32> to vector<16x32xf32>
      %30 = arith.addf %27, %29 : vector<16x32xf32>
      %c0_22 = arith.constant 0 : index
      %c0_23 = arith.constant 0 : index
      %31 = vector.load %arg18[%c0_22, %c0_23] : memref<16x32xf32, #tpu.memory_space<vmem>>, vector<16x32xf32>
      %32 = arith.addf %30, %31 : vector<16x32xf32>
      %c0_24 = arith.constant 0 : index
      %c0_25 = arith.constant 0 : index
      %33 = vector.load %arg15[%c0_24, %c0_25] : memref<1x32xf32, #tpu.memory_space<vmem>>, vector<1x32xf32>
      %c0_26 = arith.constant 0 : index
      %c0_27 = arith.constant 0 : index
      %34 = vector.load %arg16[%c0_26, %c0_27] : memref<1x32xf32, #tpu.memory_space<vmem>>, vector<1x32xf32>
      %cst_28 = arith.constant dense<0.000000e+00> : vector<16xf32>
      %35 = vector.multi_reduction <add>, %32, %cst_28 [1] : vector<16x32xf32> to vector<16xf32>
      %36 = vector.shape_cast %35 : vector<16xf32> to vector<16x1xf32>
      %cst_29 = arith.constant 3.200000e+01 : f32
      %37 = vector.broadcast %cst_29 : f32 to vector<16x1xf32>
      %38 = arith.divf %36, %37 : vector<16x1xf32>
      %39 = vector.broadcast %38 : vector<16x1xf32> to vector<16x32xf32>
      %40 = arith.subf %32, %39 : vector<16x32xf32>
      %41 = arith.mulf %40, %40 : vector<16x32xf32>
      %cst_30 = arith.constant dense<0.000000e+00> : vector<16xf32>
      %42 = vector.multi_reduction <add>, %41, %cst_30 [1] : vector<16x32xf32> to vector<16xf32>
      %43 = vector.shape_cast %42 : vector<16xf32> to vector<16x1xf32>
      %cst_31 = arith.constant 3.200000e+01 : f32
      %44 = vector.broadcast %cst_31 : f32 to vector<16x1xf32>
      %45 = arith.divf %43, %44 : vector<16x1xf32>
      %46 = vector.broadcast %38 : vector<16x1xf32> to vector<16x32xf32>
      %47 = arith.subf %32, %46 : vector<16x32xf32>
      %cst_32 = arith.constant 9.99999996E-13 : f32
      %48 = vector.broadcast %cst_32 : f32 to vector<16x1xf32>
      %49 = arith.addf %45, %48 : vector<16x1xf32>
      %50 = math.rsqrt %49 : vector<16x1xf32>
      %51 = vector.broadcast %50 : vector<16x1xf32> to vector<16x32xf32>
      %52 = arith.mulf %47, %51 : vector<16x32xf32>
      %53 = vector.broadcast %33 : vector<1x32xf32> to vector<16x32xf32>
      %54 = arith.mulf %52, %53 : vector<16x32xf32>
      %55 = vector.broadcast %34 : vector<1x32xf32> to vector<16x32xf32>
      %56 = arith.addf %54, %55 : vector<16x32xf32>
      %c0_33 = arith.constant 0 : index
      %c0_34 = arith.constant 0 : index
      %c0_35 = arith.constant 0 : index
      %57 = vector.load %arg17[%c0_33, %c0_34, %c0_35] : memref<1x16x32xf32, #tpu.memory_space<vmem>>, vector<1x16x32xf32>
      %58 = vector.shape_cast %57 : vector<1x16x32xf32> to vector<16x32xf32>
      %59 = vector.shape_cast %56 : vector<16x32xf32> to vector<1x16x32xf32>
      tpu.vector_store %arg17[%c0_33, %c0_34, %c0_35], %59 {strides = array<i32>} : memref<1x16x32xf32, #tpu.memory_space<vmem>>, vector<1x16x32xf32>,
    } else {
    }
    return
  }
  func.func @transform_0(%arg0: i32, %arg1: i32, %arg2: i32) -> (i32, i32, i32) {
    %c0_i32 = arith.constant 0 : i32
    %c0_i32_0 = arith.constant 0 : i32
    %c0_i32_1 = arith.constant 0 : i32
    return %arg0, %c0_i32, %c0_i32_0 : i32, i32, i32
  }
  func.func @transform_1(%arg0: i32, %arg1: i32, %arg2: i32) -> (i32, i32, i32) {
    %c0_i32 = arith.constant 0 : i32
    %c0_i32_0 = arith.constant 0 : i32
    return %arg0, %arg1, %c0_i32 : i32, i32, i32
  }
  func.func @transform_2(%arg0: i32, %arg1: i32, %arg2: i32) -> (i32, i32) {
    %c0_i32 = arith.constant 0 : i32
    %c0_i32_0 = arith.constant 0 : i32
    %c0_i32_1 = arith.constant 0 : i32
    return %c0_i32, %c0_i32_0 : i32, i32
  }
  func.func @transform_3(%arg0: i32, %arg1: i32, %arg2: i32) -> (i32, i32) {
    %c0_i32 = arith.constant 0 : i32
    %c0_i32_0 = arith.constant 0 : i32
    %c0_i32_1 = arith.constant 0 : i32
    return %c0_i32, %c0_i32_0 : i32, i32
  }
  func.func @transform_4(%arg0: i32, %arg1: i32, %arg2: i32) -> (i32, i32) {
    %c0_i32 = arith.constant 0 : i32
    %c0_i32_0 = arith.constant 0 : i32
    %c0_i32_1 = arith.constant 0 : i32
    return %c0_i32, %c0_i32_0 : i32, i32
  }
  func.func @transform_5(%arg0: i32, %arg1: i32, %arg2: i32) -> (i32, i32) {
    %c0_i32 = arith.constant 0 : i32
    %c0_i32_0 = arith.constant 0 : i32
    %c0_i32_1 = arith.constant 0 : i32
    return %c0_i32, %c0_i32_0 : i32, i32
  }
  func.func @transform_6(%arg0: i32, %arg1: i32, %arg2: i32) -> (i32, i32) {
    %c0_i32 = arith.constant 0 : i32
    %c0_i32_0 = arith.constant 0 : i32
    %c0_i32_1 = arith.constant 0 : i32
    return %c0_i32, %c0_i32_0 : i32, i32
  }
  func.func @transform_7(%arg0: i32, %arg1: i32, %arg2: i32) -> (i32, i32) {
    %c0_i32 = arith.constant 0 : i32
    %c0_i32_0 = arith.constant 0 : i32
    %c0_i32_1 = arith.constant 0 : i32
    return %c0_i32, %c0_i32_0 : i32, i32
  }
  func.func @transform_8(%arg0: i32, %arg1: i32, %arg2: i32) -> (i32, i32) {
    %c0_i32 = arith.constant 0 : i32
    %c0_i32_0 = arith.constant 0 : i32
    return %c0_i32, %arg2 : i32, i32
  }
  func.func @transform_9(%arg0: i32, %arg1: i32, %arg2: i32) -> (i32, i32) {
    %c0_i32 = arith.constant 0 : i32
    %c0_i32_0 = arith.constant 0 : i32
    return %c0_i32, %arg2 : i32, i32
  }
  func.func @transform_10(%arg0: i32, %arg1: i32, %arg2: i32) -> (i32, i32) {
    %c0_i32 = arith.constant 0 : i32
    %c0_i32_0 = arith.constant 0 : i32
    return %arg2, %c0_i32 : i32, i32
  }
  func.func @transform_11(%arg0: i32, %arg1: i32, %arg2: i32) -> (i32, i32) {
    %c0_i32 = arith.constant 0 : i32
    %c0_i32_0 = arith.constant 0 : i32
    %c0_i32_1 = arith.constant 0 : i32
    return %c0_i32, %c0_i32_0 : i32, i32
  }
  func.func @transform_12(%arg0: i32, %arg1: i32, %arg2: i32) -> (i32, i32) {
    %c0_i32 = arith.constant 0 : i32
    %c0_i32_0 = arith.constant 0 : i32
    %c0_i32_1 = arith.constant 0 : i32
    return %c0_i32, %c0_i32_0 : i32, i32
  }
  func.func @transform_13(%arg0: i32, %arg1: i32, %arg2: i32) -> (i32, i32) {
    %c0_i32 = arith.constant 0 : i32
    %c0_i32_0 = arith.constant 0 : i32
    %c0_i32_1 = arith.constant 0 : i32
    return %c0_i32, %c0_i32_0 : i32, i32
  }
  func.func @transform_14(%arg0: i32, %arg1: i32, %arg2: i32) -> (i32, i32, i32) {
    %c0_i32 = arith.constant 0 : i32
    %c0_i32_0 = arith.constant 0 : i32
    return %arg0, %arg1, %c0_i32 : i32, i32, i32
  }
}

</mosaic_0001>

<llo_original>
// kernel: tpu_custom_call.1
$region0: #{tpu_custom_call.1}
  #allocation0 [shape = 'u32[]', space=smem, size = 0x4, offset = 0x4, fixed_abs, tag = 'smem constant byte address 0x4 - core index']
  #allocation1 [shape = 'u32[144,128]{1,0:T(1,128)}', space=vmem, size = 0x12000, scoped, tag = 'internal scratch']
  #allocation2 [shape = 'f32[16,32]{1,0:T(8,128)}', space=vmem, size = 0x2000, scoped, tag = 'scratch operand']
  #allocation3 [shape = 'f32[16,32]{1,0:T(8,128)}', space=vmem, size = 0x2000, scoped, tag = 'scratch operand']
  %s0 = inlined_call_operand.vmem [shape: f32[2,16,32], index: 0, kind: input, shape index: {}]
  %s1 = inlined_call_operand.hbm [shape: f32[2,16,32], index: 1, kind: input, shape index: {}]
  %s2 = inlined_call_operand.vmem [shape: bf16[32,96], index: 2, kind: input, shape index: {}]
  %s3 = inlined_call_operand.vmem [shape: f32[1,96], index: 3, kind: input, shape index: {}]
  %s4 = inlined_call_operand.hbm [shape: bf16[32,32], index: 4, kind: input, shape index: {}]
  %s5 = inlined_call_operand.vmem [shape: f32[1,32], index: 5, kind: input, shape index: {}]
  %s6 = inlined_call_operand.hbm [shape: f32[1,32], index: 6, kind: input, shape index: {}]
  %s7 = inlined_call_operand.hbm [shape: f32[1,32], index: 7, kind: input, shape index: {}]
  %s8 = inlined_call_operand.hbm [shape: bf16[32,64], index: 8, kind: input, shape index: {}]
  %s9 = inlined_call_operand.hbm [shape: f32[1,64], index: 9, kind: input, shape index: {}]
  %s10 = inlined_call_operand.vmem [shape: bf16[64,32], index: 10, kind: input, shape index: {}]
  %s11 = inlined_call_operand.vmem [shape: f32[1,32], index: 11, kind: input, shape index: {}]
  %s12 = inlined_call_operand.vmem [shape: f32[1,32], index: 12, kind: input, shape index: {}]
  %s13 = inlined_call_operand.vmem [shape: f32[1,32], index: 13, kind: input, shape index: {}]
  %s14 = inlined_call_operand.hbm [shape: f32[2,16,32], index: 14, kind: output, shape index: {}]
  %s15 = sld [smem:[#allocation0]]
  $region121: #{tpu_custom_call.1} parent=0
    _
  %s17 = ssub.s32 1, %s15
  %s18 = scalar_select 0, %s17, %s15
  $region1: #{tpu_custom_call.1} parent=0
    #allocation4 [shape = 'u8[16384]{0}', space=vmem, size = 0x4000, scoped, tag = 'input window, operand 1']
    #allocation5 [shape = 's32[2]{0}', space=sflag, size = 0x8, scoped, tag = 'scoped memory for tpu_custom_call.1']
    #allocation6 [shape = 's32[2]{0}', space=sflag, size = 0x8, scoped, tag = 'scoped memory for tpu_custom_call.1']
    #allocation7 [shape = 'u8[8192]{0}', space=vmem, size = 0x2000, scoped, tag = 'input window, operand 4, single buffered']
    #allocation8 [shape = 's32[1]{0}', space=sflag, size = 0x4, scoped, tag = 'scoped memory for tpu_custom_call.1']
    #allocation9 [shape = 'u8[512]{0}', space=vmem, size = 0x400, scoped, tag = 'input window, operand 6, single buffered']
    #allocation10 [shape = 'u8[512]{0}', space=vmem, size = 0x400, scoped, tag = 'input window, operand 7, single buffered']
    #allocation11 [shape = 's32[1]{0}', space=sflag, size = 0x4, scoped, tag = 'scoped memory for tpu_custom_call.1']
    #allocation12 [shape = 'u8[8192]{0}', space=vmem, size = 0x2000, scoped, tag = 'input window, operand 8, single buffered']
    #allocation13 [shape = 'u8[512]{0}', space=vmem, size = 0x400, scoped, tag = 'input window, operand 9, single buffered']
    #allocation14 [shape = 's32[1]{0}', space=sflag, size = 0x4, scoped, tag = 'scoped memory for tpu_custom_call.1']
    #allocation15 [shape = 'u8[16384]{0}', space=vmem, size = 0x4000, scoped, tag = 'output window, operand 0']
    %19 = vsyncpa [#allocation5], 0
    %s20 = scalar_lea.sflag [#allocation5], 1
    %21 = vsyncpa %s20, 0
    %22 = vsyncpa [#allocation8], 0
    %23 = vsyncpa [#allocation11], 0
    %24 = vsyncpa [#allocation14], 0
    %25 = vsyncpa [#allocation6], 0
    %s26 = scalar_lea.sflag [#allocation6], 1
    %27 = vsyncpa %s26, 0
    loop: start=0, step=1, limit=4
    $region2: #{tpu_custom_call.1} parent=1 // loop_pre_header
      _
    $region3: #{tpu_custom_call.1} parent=1 // loop_header
      %s29 = sphi 0, %s33
      %p30 = scmp.ge.s32.totalorder %s29, 4
      %s36 = sphi 0, %s55
      %s37 = sphi 0, %s51
      %s38 = sphi 0, %s47
      %s39 = sphi 0, %s36
      %s40 = sphi 0, %s37
      %s41 = sphi 0, %s38
      %s42 = sphi 0, %s39
      %s43 = sphi 0, %s40
      %s44 = sphi 0, %s41
      %s58 = sphi 0, %s60
      %s61 = sphi 0, %s58
      %s62 = sphi 0, %s61
      %s78 = sphi 0, %s62
      %s86 = sphi 0, %s88
      %s89 = sphi 0, %s86
      %s90 = sphi 0, %s89
      %s106 = sphi 0, %s90
      %s110 = sphi 0, %s110
      %s112 = sphi 0, %s110
      %s113 = sphi 0, %s112
      %s127 = sphi 0, %s113
      %s131 = sphi 0, %s131
      %s133 = sphi 0, %s131
      %s134 = sphi 0, %s133
      %s148 = sphi 0, %s134
      %s152 = sphi 0, %s152
      %s154 = sphi 0, %s152
      %s155 = sphi 0, %s154
      %s169 = sphi 0, %s155
      %s173 = sphi 0, %s173
      %s175 = sphi 0, %s173
      %s176 = sphi 0, %s175
      %s190 = sphi 0, %s176
      %s194 = sphi 0, %s194
      %s196 = sphi 0, %s194
      %s197 = sphi 0, %s196
      %s211 = sphi 0, %s197
      %s215 = sphi 0, %s215
      %s217 = sphi 0, %s215
      %s218 = sphi 0, %s217
      %s232 = sphi 0, %s218
      %s238 = sphi 0, %s240
      %s241 = sphi 0, %s238
      %s242 = sphi 0, %s241
      %s258 = sphi 0, %s242
      %s264 = sphi 0, %s266
      %s267 = sphi 0, %s264
      %s268 = sphi 0, %s267
      %s284 = sphi 0, %s268
      %s290 = sphi 0, %s292
      %s293 = sphi 0, %s290
      %s294 = sphi 0, %s293
      %s310 = sphi 0, %s294
      %s314 = sphi 0, %s314
      %s316 = sphi 0, %s314
      %s317 = sphi 0, %s316
      %s331 = sphi 0, %s317
      %s335 = sphi 0, %s335
      %s337 = sphi 0, %s335
      %s338 = sphi 0, %s337
      %s352 = sphi 0, %s338
      %s356 = sphi 0, %s356
      %s358 = sphi 0, %s356
      %s359 = sphi 0, %s358
      %s373 = sphi 0, %s359
      %s381 = sphi 0, %s383
      %s384 = sphi 0, %s381
      %s385 = sphi 0, %s384
      %s401 = sphi 0, %s385
    $region4: #{tpu_custom_call.1} parent=1 // loop_header_branch
      %32 = sbr.rel (%p30) target = $region8
    $region5: #{tpu_custom_call.1} parent=1 // loop_body
      %s34 = ssub.s32 %s29, 1
      %s35 = ssub.s32 %s29, 2
      %s45 = sadd.s32 1, %s38
      %p46 = scmp.ge.s32.totalorder %s45, 1
      %s47 = scalar_select %p46, 0, %s45
      %s48 = sadd.s32 1, %s37
      %s49 = scalar_select %p46, %s48, %s37
      %p50 = scmp.ge.s32.totalorder %s49, 1
      %s51 = scalar_select %p50, 0, %s49
      %s52 = sadd.s32 1, %s36
      %s53 = scalar_select %p50, %s52, %s36
      %p54 = scmp.ge.s32.totalorder %s53, 2
      %s55 = scalar_select %p54, 0, %s53
      %s56 = ssub.s32 %s36, %s55
      %p57 = scmp.eq.s32.totalorder %s56, 0
      %s59 = sadd.s32 %s58, 1
      %s60 = scalar_select %p57, %s58, %s59
      %p63 = pneg %p57
      %p64 = scmp.eq.s32.totalorder %s29, 1
      %p65 = por %p63, %p64
      %p66 = scmp.ne.s32.totalorder %s58, %s61
      %p67 = scmp.eq.s32.totalorder %s29, 0
      %p68 = por %p66, %p67
      %p69 = scmp.ne.s32.totalorder %s58, %s61
      %p70 = scmp.eq.s32.totalorder %s34, 1
      %p71 = por %p69, %p70
      %p72 = scmp.ne.s32.totalorder %s61, %s62
      %p73 = scmp.eq.s32.totalorder %s34, 0
      %p74 = por %p72, %p73
      %p75 = scmp.ne.s32.totalorder %s61, %s62
      %p76 = scmp.eq.s32.totalorder %s35, 1
      %p77 = por %p75, %p76
      %p79 = scmp.ne.s32.totalorder %s62, %s78
      %p80 = scmp.eq.s32.totalorder %s35, 0
      %p81 = por %p79, %p80
      %s82 = ssub.s32 %s36, %s55
      %s83 = ssub.s32 %s37, %s51
      %s84 = sor.u32 %s82, %s83
      %p85 = scmp.eq.s32.totalorder %s84, 0
      %s87 = sadd.s32 %s86, 1
      %s88 = scalar_select %p85, %s86, %s87
      %p91 = pneg %p85
      %p92 = scmp.eq.s32.totalorder %s29, 1
      %p93 = por %p91, %p92
      %p94 = scmp.ne.s32.totalorder %s86, %s89
      %p95 = scmp.eq.s32.totalorder %s29, 0
      %p96 = por %p94, %p95
      %p97 = scmp.ne.s32.totalorder %s86, %s89
      %p98 = scmp.eq.s32.totalorder %s34, 1
      %p99 = por %p97, %p98
      %p100 = scmp.ne.s32.totalorder %s89, %s90
      %p101 = scmp.eq.s32.totalorder %s34, 0
      %p102 = por %p100, %p101
      %p103 = scmp.ne.s32.totalorder %s89, %s90
      %p104 = scmp.eq.s32.totalorder %s35, 1
      %p105 = por %p103, %p104
      %p107 = scmp.ne.s32.totalorder %s90, %s106
      %p108 = scmp.eq.s32.totalorder %s35, 0
      %p109 = por %p107, %p108
      %s111 = sadd.s32 %s110, 1
      %p114 = scmp.eq.s32.totalorder %s29, 1
      %p115 = scmp.ne.s32.totalorder %s110, %s112
      %p116 = scmp.eq.s32.totalorder %s29, 0
      %p117 = por %p115, %p116
      %p118 = scmp.ne.s32.totalorder %s110, %s112
      %p119 = scmp.eq.s32.totalorder %s34, 1
      %p120 = por %p118, %p119
      %p121 = scmp.ne.s32.totalorder %s112, %s113
      %p122 = scmp.eq.s32.totalorder %s34, 0
      %p123 = por %p121, %p122
      %p124 = scmp.ne.s32.totalorder %s112, %s113
      %p125 = scmp.eq.s32.totalorder %s35, 1
      %p126 = por %p124, %p125
      %p128 = scmp.ne.s32.totalorder %s113, %s127
      %p129 = scmp.eq.s32.totalorder %s35, 0
      %p130 = por %p128, %p129
      %s132 = sadd.s32 %s131, 1
      %p135 = scmp.eq.s32.totalorder %s29, 1
      %p136 = scmp.ne.s32.totalorder %s131, %s133
      %p137 = scmp.eq.s32.totalorder %s29, 0
      %p138 = por %p136, %p137
      %p139 = scmp.ne.s32.totalorder %s131, %s133
      %p140 = scmp.eq.s32.totalorder %s34, 1
      %p141 = por %p139, %p140
      %p142 = scmp.ne.s32.totalorder %s133, %s134
      %p143 = scmp.eq.s32.totalorder %s34, 0
      %p144 = por %p142, %p143
      %p145 = scmp.ne.s32.totalorder %s133, %s134
      %p146 = scmp.eq.s32.totalorder %s35, 1
      %p147 = por %p145, %p146
      %p149 = scmp.ne.s32.totalorder %s134, %s148
      %p150 = scmp.eq.s32.totalorder %s35, 0
      %p151 = por %p149, %p150
      %s153 = sadd.s32 %s152, 1
      %p156 = scmp.eq.s32.totalorder %s29, 1
      %p157 = scmp.ne.s32.totalorder %s152, %s154
      %p158 = scmp.eq.s32.totalorder %s29, 0
      %p159 = por %p157, %p158
      %p160 = scmp.ne.s32.totalorder %s152, %s154
      %p161 = scmp.eq.s32.totalorder %s34, 1
      %p162 = por %p160, %p161
      %p163 = scmp.ne.s32.totalorder %s154, %s155
      %p164 = scmp.eq.s32.totalorder %s34, 0
      %p165 = por %p163, %p164
      %p166 = scmp.ne.s32.totalorder %s154, %s155
      %p167 = scmp.eq.s32.totalorder %s35, 1
      %p168 = por %p166, %p167
      %p170 = scmp.ne.s32.totalorder %s155, %s169
      %p171 = scmp.eq.s32.totalorder %s35, 0
      %p172 = por %p170, %p171
      %s174 = sadd.s32 %s173, 1
      %p177 = scmp.eq.s32.totalorder %s29, 1
      %p178 = scmp.ne.s32.totalorder %s173, %s175
      %p179 = scmp.eq.s32.totalorder %s29, 0
      %p180 = por %p178, %p179
      %p181 = scmp.ne.s32.totalorder %s173, %s175
      %p182 = scmp.eq.s32.totalorder %s34, 1
      %p183 = por %p181, %p182
      %p184 = scmp.ne.s32.totalorder %s175, %s176
      %p185 = scmp.eq.s32.totalorder %s34, 0
      %p186 = por %p184, %p185
      %p187 = scmp.ne.s32.totalorder %s175, %s176
      %p188 = scmp.eq.s32.totalorder %s35, 1
      %p189 = por %p187, %p188
      %p191 = scmp.ne.s32.totalorder %s176, %s190
      %p192 = scmp.eq.s32.totalorder %s35, 0
      %p193 = por %p191, %p192
      %s195 = sadd.s32 %s194, 1
      %p198 = scmp.eq.s32.totalorder %s29, 1
      %p199 = scmp.ne.s32.totalorder %s194, %s196
      %p200 = scmp.eq.s32.totalorder %s29, 0
      %p201 = por %p199, %p200
      %p202 = scmp.ne.s32.totalorder %s194, %s196
      %p203 = scmp.eq.s32.totalorder %s34, 1
      %p204 = por %p202, %p203
      %p205 = scmp.ne.s32.totalorder %s196, %s197
      %p206 = scmp.eq.s32.totalorder %s34, 0
      %p207 = por %p205, %p206
      %p208 = scmp.ne.s32.totalorder %s196, %s197
      %p209 = scmp.eq.s32.totalorder %s35, 1
      %p210 = por %p208, %p209
      %p212 = scmp.ne.s32.totalorder %s197, %s211
      %p213 = scmp.eq.s32.totalorder %s35, 0
      %p214 = por %p212, %p213
      %s216 = sadd.s32 %s215, 1
      %p219 = scmp.eq.s32.totalorder %s29, 1
      %p220 = scmp.ne.s32.totalorder %s215, %s217
      %p221 = scmp.eq.s32.totalorder %s29, 0
      %p222 = por %p220, %p221
      %p223 = scmp.ne.s32.totalorder %s215, %s217
      %p224 = scmp.eq.s32.totalorder %s34, 1
      %p225 = por %p223, %p224
      %p226 = scmp.ne.s32.totalorder %s217, %s218
      %p227 = scmp.eq.s32.totalorder %s34, 0
      %p228 = por %p226, %p227
      %p229 = scmp.ne.s32.totalorder %s217, %s218
      %p230 = scmp.eq.s32.totalorder %s35, 1
      %p231 = por %p229, %p230
      %p233 = scmp.ne.s32.totalorder %s218, %s232
      %p234 = scmp.eq.s32.totalorder %s35, 0
      %p235 = por %p233, %p234
      %s236 = ssub.s32 %s38, %s47
      %p237 = scmp.eq.s32.totalorder %s236, 0
      %s239 = sadd.s32 %s238, 1
      %s240 = scalar_select %p237, %s238, %s239
      %p243 = pneg %p237
      %p244 = scmp.eq.s32.totalorder %s29, 1
      %p245 = por %p243, %p244
      %p246 = scmp.ne.s32.totalorder %s238, %s241
      %p247 = scmp.eq.s32.totalorder %s29, 0
      %p248 = por %p246, %p247
      %p249 = scmp.ne.s32.totalorder %s238, %s241
      %p250 = scmp.eq.s32.totalorder %s34, 1
      %p251 = por %p249, %p250
      %p252 = scmp.ne.s32.totalorder %s241, %s242
      %p253 = scmp.eq.s32.totalorder %s34, 0
      %p254 = por %p252, %p253
      %p255 = scmp.ne.s32.totalorder %s241, %s242
      %p256 = scmp.eq.s32.totalorder %s35, 1
      %p257 = por %p255, %p256
      %p259 = scmp.ne.s32.totalorder %s242, %s258
      %p260 = scmp.eq.s32.totalorder %s35, 0
      %p261 = por %p259, %p260
      %s262 = ssub.s32 %s38, %s47
      %p263 = scmp.eq.s32.totalorder %s262, 0
      %s265 = sadd.s32 %s264, 1
      %s266 = scalar_select %p263, %s264, %s265
      %p269 = pneg %p263
      %p270 = scmp.eq.s32.totalorder %s29, 1
      %p271 = por %p269, %p270
      %p272 = scmp.ne.s32.totalorder %s264, %s267
      %p273 = scmp.eq.s32.totalorder %s29, 0
      %p274 = por %p272, %p273
      %p275 = scmp.ne.s32.totalorder %s264, %s267
      %p276 = scmp.eq.s32.totalorder %s34, 1
      %p277 = por %p275, %p276
      %p278 = scmp.ne.s32.totalorder %s267, %s268
      %p279 = scmp.eq.s32.totalorder %s34, 0
      %p280 = por %p278, %p279
      %p281 = scmp.ne.s32.totalorder %s267, %s268
      %p282 = scmp.eq.s32.totalorder %s35, 1
      %p283 = por %p281, %p282
      %p285 = scmp.ne.s32.totalorder %s268, %s284
      %p286 = scmp.eq.s32.totalorder %s35, 0
      %p287 = por %p285, %p286
      %s288 = ssub.s32 %s38, %s47
      %p289 = scmp.eq.s32.totalorder %s288, 0
      %s291 = sadd.s32 %s290, 1
      %s292 = scalar_select %p289, %s290, %s291
      %p295 = pneg %p289
      %p296 = scmp.eq.s32.totalorder %s29, 1
      %p297 = por %p295, %p296
      %p298 = scmp.ne.s32.totalorder %s290, %s293
      %p299 = scmp.eq.s32.totalorder %s29, 0
      %p300 = por %p298, %p299
      %p301 = scmp.ne.s32.totalorder %s290, %s293
      %p302 = scmp.eq.s32.totalorder %s34, 1
      %p303 = por %p301, %p302
      %p304 = scmp.ne.s32.totalorder %s293, %s294
      %p305 = scmp.eq.s32.totalorder %s34, 0
      %p306 = por %p304, %p305
      %p307 = scmp.ne.s32.totalorder %s293, %s294
      %p308 = scmp.eq.s32.totalorder %s35, 1
      %p309 = por %p307, %p308
      %p311 = scmp.ne.s32.totalorder %s294, %s310
      %p312 = scmp.eq.s32.totalorder %s35, 0
      %p313 = por %p311, %p312
      %s315 = sadd.s32 %s314, 1
      %p318 = scmp.eq.s32.totalorder %s29, 1
      %p319 = scmp.ne.s32.totalorder %s314, %s316
      %p320 = scmp.eq.s32.totalorder %s29, 0
      %p321 = por %p319, %p320
      %p322 = scmp.ne.s32.totalorder %s314, %s316
      %p323 = scmp.eq.s32.totalorder %s34, 1
      %p324 = por %p322, %p323
      %p325 = scmp.ne.s32.totalorder %s316, %s317
      %p326 = scmp.eq.s32.totalorder %s34, 0
      %p327 = por %p325, %p326
      %p328 = scmp.ne.s32.totalorder %s316, %s317
      %p329 = scmp.eq.s32.totalorder %s35, 1
      %p330 = por %p328, %p329
      %p332 = scmp.ne.s32.totalorder %s317, %s331
      %p333 = scmp.eq.s32.totalorder %s35, 0
      %p334 = por %p332, %p333
      %s336 = sadd.s32 %s335, 1
      %p339 = scmp.eq.s32.totalorder %s29, 1
      %p340 = scmp.ne.s32.totalorder %s335, %s337
      %p341 = scmp.eq.s32.totalorder %s29, 0
      %p342 = por %p340, %p341
      %p343 = scmp.ne.s32.totalorder %s335, %s337
      %p344 = scmp.eq.s32.totalorder %s34, 1
      %p345 = por %p343, %p344
      %p346 = scmp.ne.s32.totalorder %s337, %s338
      %p347 = scmp.eq.s32.totalorder %s34, 0
      %p348 = por %p346, %p347
      %p349 = scmp.ne.s32.totalorder %s337, %s338
      %p350 = scmp.eq.s32.totalorder %s35, 1
      %p351 = por %p349, %p350
      %p353 = scmp.ne.s32.totalorder %s338, %s352
      %p354 = scmp.eq.s32.totalorder %s35, 0
      %p355 = por %p353, %p354
      %s357 = sadd.s32 %s356, 1
      %p360 = scmp.eq.s32.totalorder %s29, 1
      %p361 = scmp.ne.s32.totalorder %s356, %s358
      %p362 = scmp.eq.s32.totalorder %s29, 0
      %p363 = por %p361, %p362
      %p364 = scmp.ne.s32.totalorder %s356, %s358
      %p365 = scmp.eq.s32.totalorder %s34, 1
      %p366 = por %p364, %p365
      %p367 = scmp.ne.s32.totalorder %s358, %s359
      %p368 = scmp.eq.s32.totalorder %s34, 0
      %p369 = por %p367, %p368
      %p370 = scmp.ne.s32.totalorder %s358, %s359
      %p371 = scmp.eq.s32.totalorder %s35, 1
      %p372 = por %p370, %p371
      %p374 = scmp.ne.s32.totalorder %s359, %s373
      %p375 = scmp.eq.s32.totalorder %s35, 0
      %p376 = por %p374, %p375
      %s377 = ssub.s32 %s36, %s55
      %s378 = ssub.s32 %s37, %s51
      %s379 = sor.u32 %s377, %s378
      %p380 = scmp.eq.s32.totalorder %s379, 0
      %s382 = sadd.s32 %s381, 1
      %s383 = scalar_select %p380, %s381, %s382
      %p386 = pneg %p380
      %p387 = scmp.eq.s32.totalorder %s29, 1
      %p388 = por %p386, %p387
      %p389 = scmp.ne.s32.totalorder %s381, %s384
      %p390 = scmp.eq.s32.totalorder %s29, 0
      %p391 = por %p389, %p390
      %p392 = scmp.ne.s32.totalorder %s381, %s384
      %p393 = scmp.eq.s32.totalorder %s34, 1
      %p394 = por %p392, %p393
      %p395 = scmp.ne.s32.totalorder %s384, %s385
      %p396 = scmp.eq.s32.totalorder %s34, 0
      %p397 = por %p395, %p396
      %p398 = scmp.ne.s32.totalorder %s384, %s385
      %p399 = scmp.eq.s32.totalorder %s35, 1
      %p400 = por %p398, %p399
      %p402 = scmp.ne.s32.totalorder %s385, %s401
      %p403 = scmp.eq.s32.totalorder %s35, 0
      %p404 = por %p402, %p403
      %p405 = scmp.le.s32.totalorder 1, %s29
      %p406 = scmp.lt.s32.totalorder %s29, 3
      %p407 = pnand %p405, %p406
      %p408 = pneg %p407
      // Predicated region
      $region9: #{tpu_custom_call.1} parent=5 // pred_check
        _
      $region10: #{tpu_custom_call.1} parent=5 // pred_check_branch
        %410 = sbr.rel (%p407) target = $region12
      $region11: #{tpu_custom_call.1} parent=5 // pred_region
        %s411 = ssub.s32 %s29, 1
        // Predicated region
        $region13: #{tpu_custom_call.1} parent=11 // pred_check
          %p412 = pneg %p123
        $region14: #{tpu_custom_call.1} parent=11 // pred_check_branch
          %414 = sbr.rel (%p412) target = $region16
        $region15: #{tpu_custom_call.1} parent=11 // pred_region
          _
        $region16: #{tpu_custom_call.1} parent=11 // pred_fallthru
          _
        // Predicated region
        $region17: #{tpu_custom_call.1} parent=11 // pred_check
          %p415 = pneg %p144
        $region18: #{tpu_custom_call.1} parent=11 // pred_check_branch
          %417 = sbr.rel (%p415) target = $region20
        $region19: #{tpu_custom_call.1} parent=11 // pred_region
          _
        $region20: #{tpu_custom_call.1} parent=11 // pred_fallthru
          _
        // Predicated region
        $region21: #{tpu_custom_call.1} parent=11 // pred_check
          %p418 = pneg %p165
        $region22: #{tpu_custom_call.1} parent=11 // pred_check_branch
          %420 = sbr.rel (%p418) target = $region24
        $region23: #{tpu_custom_call.1} parent=11 // pred_region
          %s422 = ssub.s32 256, 256
          %423 = vsyncadd [#allocation8], %s422
          %s424 = sshll.u32 [#allocation7], 4
          %s425 = int_to_ptr.vmem [resolvable:$true] %s424
          %430 = dma.hbm_to_vmem [thread:$0]  %s4, 256, %s425, [#allocation8], 64, 64, 4
        $region24: #{tpu_custom_call.1} parent=11 // pred_fallthru
          _
        // Predicated region
        $region25: #{tpu_custom_call.1} parent=11 // pred_check
          %p431 = pneg %p186
        $region26: #{tpu_custom_call.1} parent=11 // pred_check_branch
          %433 = sbr.rel (%p431) target = $region28
        $region27: #{tpu_custom_call.1} parent=11 // pred_region
          _
        $region28: #{tpu_custom_call.1} parent=11 // pred_fallthru
          _
        // Predicated region
        $region29: #{tpu_custom_call.1} parent=11 // pred_check
          %p434 = pneg %p207
        $region30: #{tpu_custom_call.1} parent=11 // pred_check_branch
          %436 = sbr.rel (%p434) target = $region32
        $region31: #{tpu_custom_call.1} parent=11 // pred_region
          %s438 = ssub.s32 16, 16
          %439 = vsyncadd [#allocation8], %s438
          %s441 = sshll.u32 [#allocation9], 4
          %s442 = int_to_ptr.vmem [resolvable:$true] %s441
          %444 = dma.hbm_to_vmem [thread:$0]  %s6, 16, %s442, [#allocation8]
        $region32: #{tpu_custom_call.1} parent=11 // pred_fallthru
          _
        // Predicated region
        $region33: #{tpu_custom_call.1} parent=11 // pred_check
          %p445 = pneg %p228
        $region34: #{tpu_custom_call.1} parent=11 // pred_check_branch
          %447 = sbr.rel (%p445) target = $region36
        $region35: #{tpu_custom_call.1} parent=11 // pred_region
          %s449 = ssub.s32 16, 16
          %450 = vsyncadd [#allocation11], %s449
          %s452 = sshll.u32 [#allocation10], 4
          %s453 = int_to_ptr.vmem [resolvable:$true] %s452
          %455 = dma.hbm_to_vmem [thread:$0]  %s7, 16, %s453, [#allocation11]
        $region36: #{tpu_custom_call.1} parent=11 // pred_fallthru
          _
        // Predicated region
        $region37: #{tpu_custom_call.1} parent=11 // pred_check
          %p456 = pneg %p254
        $region38: #{tpu_custom_call.1} parent=11 // pred_check_branch
          %458 = sbr.rel (%p456) target = $region40
        $region39: #{tpu_custom_call.1} parent=11 // pred_region
          %s460 = ssub.s32 256, 256
          %461 = vsyncadd [#allocation11], %s460
          %s462 = smul.addr %s41, 64
          %s463 = scalar_lea.hbm %s8, %s462
          %s464 = sshll.u32 [#allocation12], 4
          %s465 = int_to_ptr.vmem [resolvable:$true] %s464
          %470 = dma.hbm_to_vmem [thread:$0]  %s463, 256, %s465, [#allocation11], 64, 64, 4
        $region40: #{tpu_custom_call.1} parent=11 // pred_fallthru
          _
        // Predicated region
        $region41: #{tpu_custom_call.1} parent=11 // pred_check
          %p471 = pneg %p280
        $region42: #{tpu_custom_call.1} parent=11 // pred_check_branch
          %473 = sbr.rel (%p471) target = $region44
        $region43: #{tpu_custom_call.1} parent=11 // pred_region
          %s475 = ssub.s32 16, 16
          %476 = vsyncadd [#allocation14], %s475
          %s477 = smul.addr %s41, 16
          %s478 = scalar_lea.hbm %s9, %s477
          %s480 = sshll.u32 [#allocation13], 4
          %s481 = int_to_ptr.vmem [resolvable:$true] %s480
          %483 = dma.hbm_to_vmem [thread:$0]  %s478, 16, %s481, [#allocation14]
        $region44: #{tpu_custom_call.1} parent=11 // pred_fallthru
          _
        // Predicated region
        $region45: #{tpu_custom_call.1} parent=11 // pred_check
          %p484 = pneg %p306
        $region46: #{tpu_custom_call.1} parent=11 // pred_check_branch
          %486 = sbr.rel (%p484) target = $region48
        $region47: #{tpu_custom_call.1} parent=11 // pred_region
          %s487 = smul.u32 8, %s41
          %p488 = scmp.lt.s32.totalorder %s487, 7
          %s489 = scalar_select %p488, %s487, 7
          %s490 = smul.addr %s489, 4
          %s491 = scalar_lea.vmem %s10, %s490
          %s492 = smul.u32 8, %s41
        $region48: #{tpu_custom_call.1} parent=11 // pred_fallthru
          _
        // Predicated region
        $region49: #{tpu_custom_call.1} parent=11 // pred_check
          %p493 = pneg %p327
        $region50: #{tpu_custom_call.1} parent=11 // pred_check_branch
          %495 = sbr.rel (%p493) target = $region52
        $region51: #{tpu_custom_call.1} parent=11 // pred_region
          _
        $region52: #{tpu_custom_call.1} parent=11 // pred_fallthru
          _
        // Predicated region
        $region53: #{tpu_custom_call.1} parent=11 // pred_check
          %p496 = pneg %p348
        $region54: #{tpu_custom_call.1} parent=11 // pred_check_branch
          %498 = sbr.rel (%p496) target = $region56
        $region55: #{tpu_custom_call.1} parent=11 // pred_region
          _
        $region56: #{tpu_custom_call.1} parent=11 // pred_fallthru
          _
        // Predicated region
        $region57: #{tpu_custom_call.1} parent=11 // pred_check
          %p499 = pneg %p369
        $region58: #{tpu_custom_call.1} parent=11 // pred_check_branch
          %501 = sbr.rel (%p499) target = $region60
        $region59: #{tpu_custom_call.1} parent=11 // pred_region
          _
        $region60: #{tpu_custom_call.1} parent=11 // pred_fallthru
          _
      $region12: #{tpu_custom_call.1} parent=5 // pred_fallthru
        _
      %p502 = scmp.lt.s32.totalorder %s29, 2
      // Predicated region
      $region61: #{tpu_custom_call.1} parent=5 // pred_check
        %p503 = pneg %p502
      $region62: #{tpu_custom_call.1} parent=5 // pred_check_branch
        %505 = sbr.rel (%p503) target = $region64
      $region63: #{tpu_custom_call.1} parent=5 // pred_region
        // Predicated region
        $region65: #{tpu_custom_call.1} parent=63 // pred_check
          %p506 = pneg %p68
        $region66: #{tpu_custom_call.1} parent=63 // pred_check_branch
          %508 = sbr.rel (%p506) target = $region68
        $region67: #{tpu_custom_call.1} parent=63 // pred_region
          %p509 = scmp.lt.s32.totalorder %s36, 1
          %s510 = scalar_select %p509, %s36, 1
          %s511 = smul.addr %s510, 2
          %s512 = smul.addr %s511, 8
          %s513 = scalar_lea.vmem %s0, %s512
        $region68: #{tpu_custom_call.1} parent=63 // pred_fallthru
          _
        // Predicated region
        $region69: #{tpu_custom_call.1} parent=63 // pred_check
          %p514 = pneg %p96
        $region70: #{tpu_custom_call.1} parent=63 // pred_check_branch
          %516 = sbr.rel (%p514) target = $region72
        $region71: #{tpu_custom_call.1} parent=63 // pred_region
          %s517 = sand.u32 %s86, 1
          %s518 = scalar_lea.sflag [#allocation5], %s517
          %s519 = sand.u32 %s86, 1
          %s520 = smul.addr %s519, 16
          %s521 = scalar_lea.vmem [#allocation4], %s520
          %s522 = smul.u32 2, %s37
          %s524 = ssub.s32 256, 256
          %525 = vsyncadd %s518, %s524
          %s526 = smul.addr %s36, 2
          %s527 = sadd.s32 %s522, %s526
          %s528 = smul.addr %s527, 128
          %s529 = scalar_lea.hbm %s1, %s528
          %s530 = sshll.u32 %s521, 4
          %s531 = int_to_ptr.vmem [resolvable:$true] %s530
          %536 = dma.hbm_to_vmem [thread:$0]  %s529, 256, %s531, %s518, 128, 128, 8
        $region72: #{tpu_custom_call.1} parent=63 // pred_fallthru
          _
      $region64: #{tpu_custom_call.1} parent=5 // pred_fallthru
        _
      %p537 = scmp.le.s32.totalorder 1, %s29
      %p538 = scmp.lt.s32.totalorder %s29, 3
      %p539 = pnand %p537, %p538
      %p540 = pneg %p539
      // Predicated region
      $region73: #{tpu_custom_call.1} parent=5 // pred_check
        _
      $region74: #{tpu_custom_call.1} parent=5 // pred_check_branch
        %542 = sbr.rel (%p539) target = $region76
      $region75: #{tpu_custom_call.1} parent=5 // pred_region
        %s543 = ssub.s32 %s29, 1
        %s544 = sand.u32 %s89, 1
        %s545 = scalar_lea.sflag [#allocation5], %s544
        %s546 = sand.u32 %s89, 1
        %s547 = smul.addr %s546, 16
        %s548 = scalar_lea.vmem [#allocation4], %s547
        // Predicated region
        $region77: #{tpu_custom_call.1} parent=75 // pred_check
          %p549 = pneg %p102
        $region78: #{tpu_custom_call.1} parent=75 // pred_check_branch
          %551 = sbr.rel (%p549) target = $region80
        $region79: #{tpu_custom_call.1} parent=75 // pred_region
          %552 = dma.done %s545, 256
        $region80: #{tpu_custom_call.1} parent=75 // pred_fallthru
          _
        // Predicated region
        $region81: #{tpu_custom_call.1} parent=75 // pred_check
          %p553 = pneg %p165
        $region82: #{tpu_custom_call.1} parent=75 // pred_check_branch
          %555 = sbr.rel (%p553) target = $region84
        $region83: #{tpu_custom_call.1} parent=75 // pred_region
          %556 = dma.done [#allocation8], 256
        $region84: #{tpu_custom_call.1} parent=75 // pred_fallthru
          _
        // Predicated region
        $region85: #{tpu_custom_call.1} parent=75 // pred_check
          %p557 = pneg %p207
        $region86: #{tpu_custom_call.1} parent=75 // pred_check_branch
          %559 = sbr.rel (%p557) target = $region88
        $region87: #{tpu_custom_call.1} parent=75 // pred_region
          %560 = dma.done [#allocation8], 16
        $region88: #{tpu_custom_call.1} parent=75 // pred_fallthru
          _
        // Predicated region
        $region89: #{tpu_custom_call.1} parent=75 // pred_check
          %p561 = pneg %p228
        $region90: #{tpu_custom_call.1} parent=75 // pred_check_branch
          %563 = sbr.rel (%p561) target = $region92
        $region91: #{tpu_custom_call.1} parent=75 // pred_region
          %564 = dma.done [#allocation11], 16
        $region92: #{tpu_custom_call.1} parent=75 // pred_fallthru
          _
        // Predicated region
        $region93: #{tpu_custom_call.1} parent=75 // pred_check
          %p565 = pneg %p254
        $region94: #{tpu_custom_call.1} parent=75 // pred_check_branch
          %567 = sbr.rel (%p565) target = $region96
        $region95: #{tpu_custom_call.1} parent=75 // pred_region
          %568 = dma.done [#allocation11], 256
        $region96: #{tpu_custom_call.1} parent=75 // pred_fallthru
          _
        // Predicated region
        $region97: #{tpu_custom_call.1} parent=75 // pred_check
          %p569 = pneg %p280
        $region98: #{tpu_custom_call.1} parent=75 // pred_check_branch
          %571 = sbr.rel (%p569) target = $region100
        $region99: #{tpu_custom_call.1} parent=75 // pred_region
          %572 = dma.done [#allocation14], 16
        $region100: #{tpu_custom_call.1} parent=75 // pred_fallthru
          _
        %p573 = scmp.lt.s32.totalorder %s39, 1
        %s574 = scalar_select %p573, %s39, 1
        %s575 = smul.addr %s574, 2
        %s576 = smul.addr %s575, 8
        %s577 = scalar_lea.vmem %s0, %s576
        %p578 = pneg %p74
        %p579 = pneg %p71
        %s580 = sand.u32 %s89, 1
        %s581 = scalar_lea.sflag [#allocation5], %s580
        %s582 = sand.u32 %s89, 1
        %s583 = smul.addr %s582, 16
        %s584 = scalar_lea.vmem [#allocation4], %s583
        %p585 = pneg %p102
        %p586 = pneg %p99
        %p587 = pneg %p123
        %p588 = pneg %p120
        %p589 = pneg %p144
        %p590 = pneg %p141
        %p591 = pneg %p165
        %p592 = pneg %p162
        %p593 = pneg %p186
        %p594 = pneg %p183
        %p595 = pneg %p207
        %p596 = pneg %p204
        %p597 = pneg %p228
        %p598 = pneg %p225
        %p599 = pneg %p254
        %p600 = pneg %p251
        %p601 = pneg %p280
        %p602 = pneg %p277
        %s603 = smul.u32 8, %s41
        %p604 = scmp.lt.s32.totalorder %s603, 7
        %s605 = scalar_select %p604, %s603, 7
        %s606 = smul.addr %s605, 4
        %s607 = scalar_lea.vmem %s10, %s606
        %p608 = pneg %p306
        %p609 = pneg %p303
        %p610 = pneg %p327
        %p611 = pneg %p324
        %p612 = pneg %p348
        %p613 = pneg %p345
        %p614 = pneg %p369
        %p615 = pneg %p366
        %p616 = pneg %p397
        %p617 = pneg %p394
        %s618 = sand.u32 %s384, 1
        %s619 = scalar_lea.sflag [#allocation6], %s618
        %s620 = sand.u32 %s384, 1
        %s621 = smul.addr %s620, 16
        %s622 = scalar_lea.vmem [#allocation15], %s621
        %p623 = scmp.lt.s32.totalorder %s39, 1
        %s624 = scalar_select %p623, %s39, 1
        %s625 = smul.addr %s624, 2
        %s626 = smul.addr %s625, 8
        %s627 = scalar_lea.vmem %s0, %s626
        %s628 = smul.u32 2, %s40
        %s629 = smul.u32 8, %s41
        %p630 = scmp.lt.s32.totalorder %s629, 7
        %s631 = scalar_select %p630, %s629, 7
        %s632 = smul.addr %s631, 4
        %s633 = scalar_lea.vmem %s10, %s632
        %s634 = smul.u32 8, %s41
        %s635 = smul.u32 2, %s40
        %p637 = scmp.eq.s32.totalorder %s41, 0
        // Predicated region
        $region101: #{tpu_custom_call.1} parent=75 // pred_check
          %p638 = pneg %p637
        $region102: #{tpu_custom_call.1} parent=75 // pred_check_branch
          %640 = sbr.rel (%p638) target = $region104
        $region103: #{tpu_custom_call.1} parent=75 // pred_region
          %v641 = vld [vmem:[%s548] sm:$0xff]
          %v642 = vld [vmem:[%s548 + $0x8] sm:$0xff]
          %v643 = vpack.c.bf16 %v642, %v641
          %v644 = vld [vmem:[%s2] sm:$0xf]
          %v645 = vld [vmem:[%s2 + $0x4] sm:$0xf]
          %v646 = vld [vmem:[%s2 + $0x8] sm:$0xf]
          %v647 = vld [vmem:[%s2 + $0xc] sm:$0xf]
          %v648 = vld [vmem:[%s3] sm:$0x1]
          %v650 = vlaneseq
          %v651 = vshrl.u32 %v650, 7
          %v652 = vsub.s32 0, %v651
          %v653 = vrot.slane %v648, %v652
          %v659 = vunpack.c.l.b16 %v644
          %v660 = vunpack.c.l.b16 %v645
          %v661 = vunpack.c.l.b16 %v646
          %v662 = vunpack.c.l.b16 %v647
          %v663 = vpack.c.b16 %v660, %v659
          %v664 = vpack.c.b16 %v662, %v661
          %vm667 = vcmask 261120
          %v669 = vsel %vm667, %v643, 0
          %671 = vmatprep.subr.bf16.mxu0 0
          %672 = vmatpush1.bf16.msra.mxu0 0
          %673 = vmatprep.subr.bf16.mxu0 0
          %674 = vmatpush1.bf16.msra.mxu0 0
          %675 = vmatprep.subr.bf16.mxu0 0
          %676 = vmatpush1.bf16.msra.mxu0 0
          %677 = vmatprep.subr.bf16.mxu0 0
          %678 = vmatpush1.bf16.msra.mxu0 0
          %679 = vmatprep.subr.bf16.mxu0 0
          %680 = vmatpush1.bf16.msra.mxu0 0
          %681 = vmatprep.subr.bf16.mxu0 0
          %682 = vmatpush1.bf16.msra.mxu0 0
          %683 = vmatprep.subr.bf16.mxu0 0
          %684 = vmatpush1.bf16.msra.mxu0 %v664
          %685 = vmatprep.subr.bf16.mxu0 0
          %686 = vmatpush1.bf16.msra.mxu0 %v663
          %687 = vmatprep.subr.bf16.mxu0 0
          %688 = vmatpush2.bf16.msra.mxu0 0
          %689 = vmatprep.subr.bf16.mxu0 0
          %690 = vmatpush2.bf16.msra.mxu0 0
          %691 = vmatprep.subr.bf16.mxu0 0
          %692 = vmatpush2.bf16.msra.mxu0 0
          %693 = vmatprep.subr.bf16.mxu0 0
          %694 = vmatpush2.bf16.msra.mxu0 0
          %695 = vmatprep.subr.bf16.mxu0 0
          %696 = vmatpush2.bf16.msra.mxu0 0
          %697 = vmatprep.subr.bf16.mxu0 0
          %698 = vmatpush2.bf16.msra.mxu0 0
          %699 = vmatprep.subr.bf16.mxu0 0
          %700 = vmatpush2.bf16.msra.mxu0 0
          %701 = vmatprep.subr.bf16.mxu0 0
          %702 = vmatpush2.bf16.msra.mxu0 0
          %703 = vmatprep.mubr.bf16.mxu0 0
          %704 = vmatmul.mubr.bf16.gmra.mxu0 %v669
          %v705 = vpop.f32.mrf.mxu0
          %v706 = vadd.f32 %v653, %v705
          %v707 = vpop.f32.mrf.mxu0
          %v708 = vpop.f32.mrf.mxu0
          %v709 = vadd.f32 %v653, %v708
          %v710 = vpop.f32.mrf.mxu0
          %711 = vdwg.mxu0
          %v712 = vmul.f32 %v706, 0.35355338
          %v713 = vmul.f32 %v709, 0.35355338
          %716 = vrot.lane.b32.xlu0 %v712, 120
          %v717 = vpop.permute.xlu0 %716
          %718 = vrot.lane.b32.xlu0 %v713, 120
          %v719 = vpop.permute.xlu0 %718
          %722 = vrot.lane.b32.xlu0 %v712, 112
          %v723 = vpop.permute.xlu0 %722
          %724 = vrot.lane.b32.xlu0 %v713, 112
          %v725 = vpop.permute.xlu0 %724
          %728 = vrot.lane.b32.xlu0 %v712, 104
          %v729 = vpop.permute.xlu0 %728
          %730 = vrot.lane.b32.xlu0 %v713, 104
          %v731 = vpop.permute.xlu0 %730
          %v734 = vcombine.low %v712, %v723
          %v735 = vcombine.high %v712, %v723
          %v737 = vunpack.c.l.s4 1983009808
          %v738 = vunpack.c.0.s8 %v737
          %v739 = vlaneseq
          %v740 = vshrl.u32 %v739, 7
          %v741 = vsub.s32 %v738, %v740
          %v742 = vrot.slane %v734, %v741
          %v744 = vunpack.c.l.s4 1983009808
          %v745 = vunpack.c.0.s8 %v744
          %v746 = vlaneseq
          %v747 = vshrl.u32 %v746, 7
          %v748 = vsub.s32 %v745, %v747
          %v749 = vrot.slane %v735, %v748
          %v750 = vcombine.low %v717, %v729
          %v751 = vcombine.high %v717, %v729
          %v753 = vunpack.c.l.s4 1983009808
          %v754 = vunpack.c.0.s8 %v753
          %v755 = vlaneseq
          %v756 = vshrl.u32 %v755, 7
          %v757 = vsub.s32 %v754, %v756
          %v758 = vrot.slane %v750, %v757
          %v760 = vunpack.c.l.s4 1983009808
          %v761 = vunpack.c.0.s8 %v760
          %v762 = vlaneseq
          %v763 = vshrl.u32 %v762, 7
          %v764 = vsub.s32 %v761, %v763
          %v765 = vrot.slane %v751, %v764
          %v766 = vcombine.low %v742, %v758
          %v767 = vcombine.high %v742, %v758
          %v769 = vunpack.c.l.s4 1934713408
          %v770 = vunpack.c.0.s8 %v769
          %v771 = vlaneseq
          %v772 = vshrl.u32 %v771, 7
          %v773 = vsub.s32 %v770, %v772
          %v774 = vrot.slane %v766, %v773
          %v776 = vunpack.c.l.s4 1934713408
          %v777 = vunpack.c.0.s8 %v776
          %v778 = vlaneseq
          %v779 = vshrl.u32 %v778, 7
          %v780 = vsub.s32 %v777, %v779
          %v781 = vrot.slane %v767, %v780
          %v782 = vcombine.low %v749, %v765
          %v783 = vcombine.high %v749, %v765
          %v785 = vunpack.c.l.s4 1934713408
          %v786 = vunpack.c.0.s8 %v785
          %v787 = vlaneseq
          %v788 = vshrl.u32 %v787, 7
          %v789 = vsub.s32 %v786, %v788
          %v790 = vrot.slane %v782, %v789
          %v792 = vunpack.c.l.s4 1934713408
          %v793 = vunpack.c.0.s8 %v792
          %v794 = vlaneseq
          %v795 = vshrl.u32 %v794, 7
          %v796 = vsub.s32 %v793, %v795
          %v797 = vrot.slane %v783, %v796
          %v798 = vcombine.high %v774, 0.0
          %v799 = vcombine.high %v781, 0.0
          %v800 = vcombine.high %v790, 0.0
          %v801 = vcombine.high %v797, 0.0
          %v802 = vcombine.low %v713, %v725
          %v803 = vcombine.high %v713, %v725
          %v805 = vunpack.c.l.s4 1983009808
          %v806 = vunpack.c.0.s8 %v805
          %v807 = vlaneseq
          %v808 = vshrl.u32 %v807, 7
          %v809 = vsub.s32 %v806, %v808
          %v810 = vrot.slane %v802, %v809
          %v812 = vunpack.c.l.s4 1983009808
          %v813 = vunpack.c.0.s8 %v812
          %v814 = vlaneseq
          %v815 = vshrl.u32 %v814, 7
          %v816 = vsub.s32 %v813, %v815
          %v817 = vrot.slane %v803, %v816
          %v818 = vcombine.low %v719, %v731
          %v819 = vcombine.high %v719, %v731
          %v821 = vunpack.c.l.s4 1983009808
          %v822 = vunpack.c.0.s8 %v821
          %v823 = vlaneseq
          %v824 = vshrl.u32 %v823, 7
          %v825 = vsub.s32 %v822, %v824
          %v826 = vrot.slane %v818, %v825
          %v828 = vunpack.c.l.s4 1983009808
          %v829 = vunpack.c.0.s8 %v828
          %v830 = vlaneseq
          %v831 = vshrl.u32 %v830, 7
          %v832 = vsub.s32 %v829, %v831
          %v833 = vrot.slane %v819, %v832
          %v834 = vcombine.low %v810, %v826
          %v835 = vcombine.high %v810, %v826
          %v837 = vunpack.c.l.s4 1934713408
          %v838 = vunpack.c.0.s8 %v837
          %v839 = vlaneseq
          %v840 = vshrl.u32 %v839, 7
          %v841 = vsub.s32 %v838, %v840
          %v842 = vrot.slane %v834, %v841
          %v844 = vunpack.c.l.s4 1934713408
          %v845 = vunpack.c.0.s8 %v844
          %v846 = vlaneseq
          %v847 = vshrl.u32 %v846, 7
          %v848 = vsub.s32 %v845, %v847
          %v849 = vrot.slane %v835, %v848
          %v850 = vcombine.low %v817, %v833
          %v851 = vcombine.high %v817, %v833
          %v853 = vunpack.c.l.s4 1934713408
          %v854 = vunpack.c.0.s8 %v853
          %v855 = vlaneseq
          %v856 = vshrl.u32 %v855, 7
          %v857 = vsub.s32 %v854, %v856
          %v858 = vrot.slane %v850, %v857
          %v860 = vunpack.c.l.s4 1934713408
          %v861 = vunpack.c.0.s8 %v860
          %v862 = vlaneseq
          %v863 = vshrl.u32 %v862, 7
          %v864 = vsub.s32 %v861, %v863
          %v865 = vrot.slane %v851, %v864
          %v866 = vcombine.high %v842, 0.0
          %v867 = vcombine.high %v849, 0.0
          %v868 = vcombine.high %v858, 0.0
          %v869 = vcombine.high %v865, 0.0
          %v870 = vcombine.low %v774, %v781
          %v872 = vunpack.c.l.s4 1983009808
          %v873 = vunpack.c.0.s8 %v872
          %v874 = vlaneseq
          %v875 = vshrl.u32 %v874, 7
          %v876 = vsub.s32 %v873, %v875
          %v877 = vrot.slane %v870, %v876
          %v878 = vcombine.low %v798, %v799
          %v880 = vunpack.c.l.s4 1983009808
          %v881 = vunpack.c.0.s8 %v880
          %v882 = vlaneseq
          %v883 = vshrl.u32 %v882, 7
          %v884 = vsub.s32 %v881, %v883
          %v885 = vrot.slane %v878, %v884
          %v886 = vcombine.low %v790, %v797
          %v888 = vunpack.c.l.s4 1983009808
          %v889 = vunpack.c.0.s8 %v888
          %v890 = vlaneseq
          %v891 = vshrl.u32 %v890, 7
          %v892 = vsub.s32 %v889, %v891
          %v893 = vrot.slane %v886, %v892
          %v894 = vcombine.low %v800, %v801
          %v896 = vunpack.c.l.s4 1983009808
          %v897 = vunpack.c.0.s8 %v896
          %v898 = vlaneseq
          %v899 = vshrl.u32 %v898, 7
          %v900 = vsub.s32 %v897, %v899
          %v901 = vrot.slane %v894, %v900
          %v902 = vcombine.low %v877, %v885
          %v903 = vcombine.high %v877, %v885
          %v905 = vunpack.c.l.s4 1934713408
          %v906 = vunpack.c.0.s8 %v905
          %v907 = vlaneseq
          %v908 = vshrl.u32 %v907, 7
          %v909 = vsub.s32 %v906, %v908
          %v910 = vrot.slane %v902, %v909
          %v912 = vunpack.c.l.s4 1934713408
          %v913 = vunpack.c.0.s8 %v912
          %v914 = vlaneseq
          %v915 = vshrl.u32 %v914, 7
          %v916 = vsub.s32 %v913, %v915
          %v917 = vrot.slane %v903, %v916
          %v918 = vcombine.low %v893, %v901
          %v919 = vcombine.high %v893, %v901
          %v921 = vunpack.c.l.s4 1934713408
          %v922 = vunpack.c.0.s8 %v921
          %v923 = vlaneseq
          %v924 = vshrl.u32 %v923, 7
          %v925 = vsub.s32 %v922, %v924
          %v926 = vrot.slane %v918, %v925
          %v928 = vunpack.c.l.s4 1934713408
          %v929 = vunpack.c.0.s8 %v928
          %v930 = vlaneseq
          %v931 = vshrl.u32 %v930, 7
          %v932 = vsub.s32 %v929, %v931
          %v933 = vrot.slane %v919, %v932
          %v934 = vcombine.low %v910, %v926
          %v935 = vcombine.high %v910, %v926
          %v936 = vcombine.low %v917, %v933
          %v937 = vcombine.high %v917, %v933
          %v938 = vcombine.low %v842, %v849
          %v940 = vunpack.c.l.s4 1983009808
          %v941 = vunpack.c.0.s8 %v940
          %v942 = vlaneseq
          %v943 = vshrl.u32 %v942, 7
          %v944 = vsub.s32 %v941, %v943
          %v945 = vrot.slane %v938, %v944
          %v946 = vcombine.low %v866, %v867
          %v948 = vunpack.c.l.s4 1983009808
          %v949 = vunpack.c.0.s8 %v948
          %v950 = vlaneseq
          %v951 = vshrl.u32 %v950, 7
          %v952 = vsub.s32 %v949, %v951
          %v953 = vrot.slane %v946, %v952
          %v954 = vcombine.low %v858, %v865
          %v956 = vunpack.c.l.s4 1983009808
          %v957 = vunpack.c.0.s8 %v956
          %v958 = vlaneseq
          %v959 = vshrl.u32 %v958, 7
          %v960 = vsub.s32 %v957, %v959
          %v961 = vrot.slane %v954, %v960
          %v962 = vcombine.low %v868, %v869
          %v964 = vunpack.c.l.s4 1983009808
          %v965 = vunpack.c.0.s8 %v964
          %v966 = vlaneseq
          %v967 = vshrl.u32 %v966, 7
          %v968 = vsub.s32 %v965, %v967
          %v969 = vrot.slane %v962, %v968
          %v970 = vcombine.low %v945, %v953
          %v971 = vcombine.high %v945, %v953
          %v973 = vunpack.c.l.s4 1934713408
          %v974 = vunpack.c.0.s8 %v973
          %v975 = vlaneseq
          %v976 = vshrl.u32 %v975, 7
          %v977 = vsub.s32 %v974, %v976
          %v978 = vrot.slane %v970, %v977
          %v980 = vunpack.c.l.s4 1934713408
          %v981 = vunpack.c.0.s8 %v980
          %v982 = vlaneseq
          %v983 = vshrl.u32 %v982, 7
          %v984 = vsub.s32 %v981, %v983
          %v985 = vrot.slane %v971, %v984
          %v986 = vcombine.low %v961, %v969
          %v987 = vcombine.high %v961, %v969
          %v989 = vunpack.c.l.s4 1934713408
          %v990 = vunpack.c.0.s8 %v989
          %v991 = vlaneseq
          %v992 = vshrl.u32 %v991, 7
          %v993 = vsub.s32 %v990, %v992
          %v994 = vrot.slane %v986, %v993
          %v996 = vunpack.c.l.s4 1934713408
          %v997 = vunpack.c.0.s8 %v996
          %v998 = vlaneseq
          %v999 = vshrl.u32 %v998, 7
          %v1000 = vsub.s32 %v997, %v999
          %v1001 = vrot.slane %v987, %v1000
          %v1002 = vcombine.low %v978, %v994
          %v1003 = vcombine.high %v978, %v994
          %v1004 = vcombine.low %v985, %v1001
          %v1005 = vcombine.high %v985, %v1001
          %v1006 = vpack.c.bf16 %v1002, %v934
          %v1007 = vpack.c.bf16 %v1003, %v935
          %v1008 = vpack.c.bf16 %v1004, %v936
          %v1009 = vpack.c.bf16 %v1005, %v937
          %1012 = vrot.lane.b32.xlu0 %v706, 120
          %v1013 = vpop.permute.xlu0 %1012
          %1014 = vrot.lane.b32.xlu0 %v709, 120
          %v1015 = vpop.permute.xlu0 %1014
          %1016 = vrot.lane.b32.xlu0 %v706, 112
          %v1017 = vpop.permute.xlu0 %1016
          %1018 = vrot.lane.b32.xlu0 %v709, 112
          %v1019 = vpop.permute.xlu0 %1018
          %1020 = vrot.lane.b32.xlu0 %v706, 104
          %v1021 = vpop.permute.xlu0 %1020
          %1022 = vrot.lane.b32.xlu0 %v709, 104
          %v1023 = vpop.permute.xlu0 %1022
          %1024 = vrot.lane.b32.xlu0 %v706, 96
          %v1025 = vpop.permute.xlu0 %1024
          %1026 = vrot.lane.b32.xlu0 %v709, 96
          %v1027 = vpop.permute.xlu0 %1026
          %1028 = vrot.lane.b32.xlu0 %v1013, 96
          %v1029 = vpop.permute.xlu0 %1028
          %1030 = vrot.lane.b32.xlu0 %v1015, 96
          %v1031 = vpop.permute.xlu0 %1030
          %1032 = vrot.lane.b32.xlu0 %v1017, 96
          %v1033 = vpop.permute.xlu0 %1032
          %1034 = vrot.lane.b32.xlu0 %v1019, 96
          %v1035 = vpop.permute.xlu0 %1034
          %1036 = vrot.lane.b32.xlu0 %v1021, 96
          %v1037 = vpop.permute.xlu0 %1036
          %1038 = vrot.lane.b32.xlu0 %v1023, 96
          %v1039 = vpop.permute.xlu0 %1038
          %v1048 = vcombine.low %v1025, %v1033
          %v1049 = vcombine.high %v1025, %v1033
          %v1051 = vunpack.c.l.s4 1983009808
          %v1052 = vunpack.c.0.s8 %v1051
          %v1053 = vlaneseq
          %v1054 = vshrl.u32 %v1053, 7
          %v1055 = vsub.s32 %v1052, %v1054
          %v1056 = vrot.slane %v1048, %v1055
          %v1058 = vunpack.c.l.s4 1983009808
          %v1059 = vunpack.c.0.s8 %v1058
          %v1060 = vlaneseq
          %v1061 = vshrl.u32 %v1060, 7
          %v1062 = vsub.s32 %v1059, %v1061
          %v1063 = vrot.slane %v1049, %v1062
          %v1064 = vcombine.low %v1029, %v1037
          %v1065 = vcombine.high %v1029, %v1037
          %v1067 = vunpack.c.l.s4 1983009808
          %v1068 = vunpack.c.0.s8 %v1067
          %v1069 = vlaneseq
          %v1070 = vshrl.u32 %v1069, 7
          %v1071 = vsub.s32 %v1068, %v1070
          %v1072 = vrot.slane %v1064, %v1071
          %v1074 = vunpack.c.l.s4 1983009808
          %v1075 = vunpack.c.0.s8 %v1074
          %v1076 = vlaneseq
          %v1077 = vshrl.u32 %v1076, 7
          %v1078 = vsub.s32 %v1075, %v1077
          %v1079 = vrot.slane %v1065, %v1078
          %v1080 = vcombine.low %v1056, %v1072
          %v1081 = vcombine.high %v1056, %v1072
          %v1083 = vunpack.c.l.s4 1934713408
          %v1084 = vunpack.c.0.s8 %v1083
          %v1085 = vlaneseq
          %v1086 = vshrl.u32 %v1085, 7
          %v1087 = vsub.s32 %v1084, %v1086
          %v1088 = vrot.slane %v1080, %v1087
          %v1090 = vunpack.c.l.s4 1934713408
          %v1091 = vunpack.c.0.s8 %v1090
          %v1092 = vlaneseq
          %v1093 = vshrl.u32 %v1092, 7
          %v1094 = vsub.s32 %v1091, %v1093
          %v1095 = vrot.slane %v1081, %v1094
          %v1096 = vcombine.low %v1063, %v1079
          %v1097 = vcombine.high %v1063, %v1079
          %v1099 = vunpack.c.l.s4 1934713408
          %v1100 = vunpack.c.0.s8 %v1099
          %v1101 = vlaneseq
          %v1102 = vshrl.u32 %v1101, 7
          %v1103 = vsub.s32 %v1100, %v1102
          %v1104 = vrot.slane %v1096, %v1103
          %v1106 = vunpack.c.l.s4 1934713408
          %v1107 = vunpack.c.0.s8 %v1106
          %v1108 = vlaneseq
          %v1109 = vshrl.u32 %v1108, 7
          %v1110 = vsub.s32 %v1107, %v1109
          %v1111 = vrot.slane %v1097, %v1110
          %v1112 = vcombine.high %v1088, 0.0
          %v1113 = vcombine.high %v1095, 0.0
          %v1114 = vcombine.high %v1104, 0.0
          %v1115 = vcombine.high %v1111, 0.0
          %v1116 = vcombine.low %v1027, %v1035
          %v1117 = vcombine.high %v1027, %v1035
          %v1119 = vunpack.c.l.s4 1983009808
          %v1120 = vunpack.c.0.s8 %v1119
          %v1121 = vlaneseq
          %v1122 = vshrl.u32 %v1121, 7
          %v1123 = vsub.s32 %v1120, %v1122
          %v1124 = vrot.slane %v1116, %v1123
          %v1126 = vunpack.c.l.s4 1983009808
          %v1127 = vunpack.c.0.s8 %v1126
          %v1128 = vlaneseq
          %v1129 = vshrl.u32 %v1128, 7
          %v1130 = vsub.s32 %v1127, %v1129
          %v1131 = vrot.slane %v1117, %v1130
          %v1132 = vcombine.low %v1031, %v1039
          %v1133 = vcombine.high %v1031, %v1039
          %v1135 = vunpack.c.l.s4 1983009808
          %v1136 = vunpack.c.0.s8 %v1135
          %v1137 = vlaneseq
          %v1138 = vshrl.u32 %v1137, 7
          %v1139 = vsub.s32 %v1136, %v1138
          %v1140 = vrot.slane %v1132, %v1139
          %v1142 = vunpack.c.l.s4 1983009808
          %v1143 = vunpack.c.0.s8 %v1142
          %v1144 = vlaneseq
          %v1145 = vshrl.u32 %v1144, 7
          %v1146 = vsub.s32 %v1143, %v1145
          %v1147 = vrot.slane %v1133, %v1146
          %v1148 = vcombine.low %v1124, %v1140
          %v1149 = vcombine.high %v1124, %v1140
          %v1151 = vunpack.c.l.s4 1934713408
          %v1152 = vunpack.c.0.s8 %v1151
          %v1153 = vlaneseq
          %v1154 = vshrl.u32 %v1153, 7
          %v1155 = vsub.s32 %v1152, %v1154
          %v1156 = vrot.slane %v1148, %v1155
          %v1158 = vunpack.c.l.s4 1934713408
          %v1159 = vunpack.c.0.s8 %v1158
          %v1160 = vlaneseq
          %v1161 = vshrl.u32 %v1160, 7
          %v1162 = vsub.s32 %v1159, %v1161
          %v1163 = vrot.slane %v1149, %v1162
          %v1164 = vcombine.low %v1131, %v1147
          %v1165 = vcombine.high %v1131, %v1147
          %v1167 = vunpack.c.l.s4 1934713408
          %v1168 = vunpack.c.0.s8 %v1167
          %v1169 = vlaneseq
          %v1170 = vshrl.u32 %v1169, 7
          %v1171 = vsub.s32 %v1168, %v1170
          %v1172 = vrot.slane %v1164, %v1171
          %v1174 = vunpack.c.l.s4 1934713408
          %v1175 = vunpack.c.0.s8 %v1174
          %v1176 = vlaneseq
          %v1177 = vshrl.u32 %v1176, 7
          %v1178 = vsub.s32 %v1175, %v1177
          %v1179 = vrot.slane %v1165, %v1178
          %v1180 = vcombine.high %v1156, 0.0
          %v1181 = vcombine.high %v1163, 0.0
          %v1182 = vcombine.high %v1172, 0.0
          %v1183 = vcombine.high %v1179, 0.0
          %v1184 = vcombine.low %v1088, %v1095
          %v1186 = vunpack.c.l.s4 1983009808
          %v1187 = vunpack.c.0.s8 %v1186
          %v1188 = vlaneseq
          %v1189 = vshrl.u32 %v1188, 7
          %v1190 = vsub.s32 %v1187, %v1189
          %v1191 = vrot.slane %v1184, %v1190
          %v1192 = vcombine.low %v1112, %v1113
          %v1194 = vunpack.c.l.s4 1983009808
          %v1195 = vunpack.c.0.s8 %v1194
          %v1196 = vlaneseq
          %v1197 = vshrl.u32 %v1196, 7
          %v1198 = vsub.s32 %v1195, %v1197
          %v1199 = vrot.slane %v1192, %v1198
          %v1200 = vcombine.low %v1104, %v1111
          %v1202 = vunpack.c.l.s4 1983009808
          %v1203 = vunpack.c.0.s8 %v1202
          %v1204 = vlaneseq
          %v1205 = vshrl.u32 %v1204, 7
          %v1206 = vsub.s32 %v1203, %v1205
          %v1207 = vrot.slane %v1200, %v1206
          %v1208 = vcombine.low %v1114, %v1115
          %v1210 = vunpack.c.l.s4 1983009808
          %v1211 = vunpack.c.0.s8 %v1210
          %v1212 = vlaneseq
          %v1213 = vshrl.u32 %v1212, 7
          %v1214 = vsub.s32 %v1211, %v1213
          %v1215 = vrot.slane %v1208, %v1214
          %v1216 = vcombine.low %v1191, %v1199
          %v1217 = vcombine.high %v1191, %v1199
          %v1219 = vunpack.c.l.s4 1934713408
          %v1220 = vunpack.c.0.s8 %v1219
          %v1221 = vlaneseq
          %v1222 = vshrl.u32 %v1221, 7
          %v1223 = vsub.s32 %v1220, %v1222
          %v1224 = vrot.slane %v1216, %v1223
          %v1226 = vunpack.c.l.s4 1934713408
          %v1227 = vunpack.c.0.s8 %v1226
          %v1228 = vlaneseq
          %v1229 = vshrl.u32 %v1228, 7
          %v1230 = vsub.s32 %v1227, %v1229
          %v1231 = vrot.slane %v1217, %v1230
          %v1232 = vcombine.low %v1207, %v1215
          %v1233 = vcombine.high %v1207, %v1215
          %v1235 = vunpack.c.l.s4 1934713408
          %v1236 = vunpack.c.0.s8 %v1235
          %v1237 = vlaneseq
          %v1238 = vshrl.u32 %v1237, 7
          %v1239 = vsub.s32 %v1236, %v1238
          %v1240 = vrot.slane %v1232, %v1239
          %v1242 = vunpack.c.l.s4 1934713408
          %v1243 = vunpack.c.0.s8 %v1242
          %v1244 = vlaneseq
          %v1245 = vshrl.u32 %v1244, 7
          %v1246 = vsub.s32 %v1243, %v1245
          %v1247 = vrot.slane %v1233, %v1246
          %v1248 = vcombine.low %v1224, %v1240
          %v1249 = vcombine.high %v1224, %v1240
          %v1250 = vcombine.low %v1231, %v1247
          %v1251 = vcombine.high %v1231, %v1247
          %v1252 = vcombine.low %v1156, %v1163
          %v1254 = vunpack.c.l.s4 1983009808
          %v1255 = vunpack.c.0.s8 %v1254
          %v1256 = vlaneseq
          %v1257 = vshrl.u32 %v1256, 7
          %v1258 = vsub.s32 %v1255, %v1257
          %v1259 = vrot.slane %v1252, %v1258
          %v1260 = vcombine.low %v1180, %v1181
          %v1262 = vunpack.c.l.s4 1983009808
          %v1263 = vunpack.c.0.s8 %v1262
          %v1264 = vlaneseq
          %v1265 = vshrl.u32 %v1264, 7
          %v1266 = vsub.s32 %v1263, %v1265
          %v1267 = vrot.slane %v1260, %v1266
          %v1268 = vcombine.low %v1172, %v1179
          %v1270 = vunpack.c.l.s4 1983009808
          %v1271 = vunpack.c.0.s8 %v1270
          %v1272 = vlaneseq
          %v1273 = vshrl.u32 %v1272, 7
          %v1274 = vsub.s32 %v1271, %v1273
          %v1275 = vrot.slane %v1268, %v1274
          %v1276 = vcombine.low %v1182, %v1183
          %v1278 = vunpack.c.l.s4 1983009808
          %v1279 = vunpack.c.0.s8 %v1278
          %v1280 = vlaneseq
          %v1281 = vshrl.u32 %v1280, 7
          %v1282 = vsub.s32 %v1279, %v1281
          %v1283 = vrot.slane %v1276, %v1282
          %v1284 = vcombine.low %v1259, %v1267
          %v1285 = vcombine.high %v1259, %v1267
          %v1287 = vunpack.c.l.s4 1934713408
          %v1288 = vunpack.c.0.s8 %v1287
          %v1289 = vlaneseq
          %v1290 = vshrl.u32 %v1289, 7
          %v1291 = vsub.s32 %v1288, %v1290
          %v1292 = vrot.slane %v1284, %v1291
          %v1294 = vunpack.c.l.s4 1934713408
          %v1295 = vunpack.c.0.s8 %v1294
          %v1296 = vlaneseq
          %v1297 = vshrl.u32 %v1296, 7
          %v1298 = vsub.s32 %v1295, %v1297
          %v1299 = vrot.slane %v1285, %v1298
          %v1300 = vcombine.low %v1275, %v1283
          %v1301 = vcombine.high %v1275, %v1283
          %v1303 = vunpack.c.l.s4 1934713408
          %v1304 = vunpack.c.0.s8 %v1303
          %v1305 = vlaneseq
          %v1306 = vshrl.u32 %v1305, 7
          %v1307 = vsub.s32 %v1304, %v1306
          %v1308 = vrot.slane %v1300, %v1307
          %v1310 = vunpack.c.l.s4 1934713408
          %v1311 = vunpack.c.0.s8 %v1310
          %v1312 = vlaneseq
          %v1313 = vshrl.u32 %v1312, 7
          %v1314 = vsub.s32 %v1311, %v1313
          %v1315 = vrot.slane %v1301, %v1314
          %v1316 = vcombine.low %v1292, %v1308
          %v1317 = vcombine.high %v1292, %v1308
          %v1318 = vcombine.low %v1299, %v1315
          %v1319 = vcombine.high %v1299, %v1315
          %v1320 = vpack.c.bf16 %v1316, %v1248
          %v1321 = vpack.c.bf16 %v1317, %v1249
          %v1322 = vpack.c.bf16 %v1318, %v1250
          %v1323 = vpack.c.bf16 %v1319, %v1251
          %1324 = vrot.lane.b32.xlu0 %v706, 64
          %v1325 = vpop.permute.xlu0 %1324
          %1326 = vrot.lane.b32.xlu0 %v709, 64
          %v1327 = vpop.permute.xlu0 %1326
          %1328 = vrot.lane.b32.xlu0 %v1013, 64
          %v1329 = vpop.permute.xlu0 %1328
          %1330 = vrot.lane.b32.xlu0 %v1015, 64
          %v1331 = vpop.permute.xlu0 %1330
          %1332 = vrot.lane.b32.xlu0 %v1017, 64
          %v1333 = vpop.permute.xlu0 %1332
          %1334 = vrot.lane.b32.xlu0 %v1019, 64
          %v1335 = vpop.permute.xlu0 %1334
          %1336 = vrot.lane.b32.xlu0 %v1021, 64
          %v1337 = vpop.permute.xlu0 %1336
          %1338 = vrot.lane.b32.xlu0 %v1023, 64
          %v1339 = vpop.permute.xlu0 %1338
          %v1348 = vcombine.low %v1325, %v1333
          %v1349 = vcombine.high %v1325, %v1333
          %v1351 = vunpack.c.l.s4 1983009808
          %v1352 = vunpack.c.0.s8 %v1351
          %v1353 = vlaneseq
          %v1354 = vshrl.u32 %v1353, 7
          %v1355 = vsub.s32 %v1352, %v1354
          %v1356 = vrot.slane %v1348, %v1355
          %v1358 = vunpack.c.l.s4 1983009808
          %v1359 = vunpack.c.0.s8 %v1358
          %v1360 = vlaneseq
          %v1361 = vshrl.u32 %v1360, 7
          %v1362 = vsub.s32 %v1359, %v1361
          %v1363 = vrot.slane %v1349, %v1362
          %v1364 = vcombine.low %v1329, %v1337
          %v1365 = vcombine.high %v1329, %v1337
          %v1367 = vunpack.c.l.s4 1983009808
          %v1368 = vunpack.c.0.s8 %v1367
          %v1369 = vlaneseq
          %v1370 = vshrl.u32 %v1369, 7
          %v1371 = vsub.s32 %v1368, %v1370
          %v1372 = vrot.slane %v1364, %v1371
          %v1374 = vunpack.c.l.s4 1983009808
          %v1375 = vunpack.c.0.s8 %v1374
          %v1376 = vlaneseq
          %v1377 = vshrl.u32 %v1376, 7
          %v1378 = vsub.s32 %v1375, %v1377
          %v1379 = vrot.slane %v1365, %v1378
          %v1380 = vcombine.low %v1356, %v1372
          %v1381 = vcombine.high %v1356, %v1372
          %v1383 = vunpack.c.l.s4 1934713408
          %v1384 = vunpack.c.0.s8 %v1383
          %v1385 = vlaneseq
          %v1386 = vshrl.u32 %v1385, 7
          %v1387 = vsub.s32 %v1384, %v1386
          %v1388 = vrot.slane %v1380, %v1387
          %v1390 = vunpack.c.l.s4 1934713408
          %v1391 = vunpack.c.0.s8 %v1390
          %v1392 = vlaneseq
          %v1393 = vshrl.u32 %v1392, 7
          %v1394 = vsub.s32 %v1391, %v1393
          %v1395 = vrot.slane %v1381, %v1394
          %v1396 = vcombine.low %v1363, %v1379
          %v1397 = vcombine.high %v1363, %v1379
          %v1399 = vunpack.c.l.s4 1934713408
          %v1400 = vunpack.c.0.s8 %v1399
          %v1401 = vlaneseq
          %v1402 = vshrl.u32 %v1401, 7
          %v1403 = vsub.s32 %v1400, %v1402
          %v1404 = vrot.slane %v1396, %v1403
          %v1406 = vunpack.c.l.s4 1934713408
          %v1407 = vunpack.c.0.s8 %v1406
          %v1408 = vlaneseq
          %v1409 = vshrl.u32 %v1408, 7
          %v1410 = vsub.s32 %v1407, %v1409
          %v1411 = vrot.slane %v1397, %v1410
          %v1412 = vcombine.high %v1388, 0.0
          %v1413 = vcombine.high %v1395, 0.0
          %v1414 = vcombine.high %v1404, 0.0
          %v1415 = vcombine.high %v1411, 0.0
          %v1416 = vcombine.low %v1327, %v1335
          %v1417 = vcombine.high %v1327, %v1335
          %v1419 = vunpack.c.l.s4 1983009808
          %v1420 = vunpack.c.0.s8 %v1419
          %v1421 = vlaneseq
          %v1422 = vshrl.u32 %v1421, 7
          %v1423 = vsub.s32 %v1420, %v1422
          %v1424 = vrot.slane %v1416, %v1423
          %v1426 = vunpack.c.l.s4 1983009808
          %v1427 = vunpack.c.0.s8 %v1426
          %v1428 = vlaneseq
          %v1429 = vshrl.u32 %v1428, 7
          %v1430 = vsub.s32 %v1427, %v1429
          %v1431 = vrot.slane %v1417, %v1430
          %v1432 = vcombine.low %v1331, %v1339
          %v1433 = vcombine.high %v1331, %v1339
          %v1435 = vunpack.c.l.s4 1983009808
          %v1436 = vunpack.c.0.s8 %v1435
          %v1437 = vlaneseq
          %v1438 = vshrl.u32 %v1437, 7
          %v1439 = vsub.s32 %v1436, %v1438
          %v1440 = vrot.slane %v1432, %v1439
          %v1442 = vunpack.c.l.s4 1983009808
          %v1443 = vunpack.c.0.s8 %v1442
          %v1444 = vlaneseq
          %v1445 = vshrl.u32 %v1444, 7
          %v1446 = vsub.s32 %v1443, %v1445
          %v1447 = vrot.slane %v1433, %v1446
          %v1448 = vcombine.low %v1424, %v1440
          %v1449 = vcombine.high %v1424, %v1440
          %v1451 = vunpack.c.l.s4 1934713408
          %v1452 = vunpack.c.0.s8 %v1451
          %v1453 = vlaneseq
          %v1454 = vshrl.u32 %v1453, 7
          %v1455 = vsub.s32 %v1452, %v1454
          %v1456 = vrot.slane %v1448, %v1455
          %v1458 = vunpack.c.l.s4 1934713408
          %v1459 = vunpack.c.0.s8 %v1458
          %v1460 = vlaneseq
          %v1461 = vshrl.u32 %v1460, 7
          %v1462 = vsub.s32 %v1459, %v1461
          %v1463 = vrot.slane %v1449, %v1462
          %v1464 = vcombine.low %v1431, %v1447
          %v1465 = vcombine.high %v1431, %v1447
          %v1467 = vunpack.c.l.s4 1934713408
          %v1468 = vunpack.c.0.s8 %v1467
          %v1469 = vlaneseq
          %v1470 = vshrl.u32 %v1469, 7
          %v1471 = vsub.s32 %v1468, %v1470
          %v1472 = vrot.slane %v1464, %v1471
          %v1474 = vunpack.c.l.s4 1934713408
          %v1475 = vunpack.c.0.s8 %v1474
          %v1476 = vlaneseq
          %v1477 = vshrl.u32 %v1476, 7
          %v1478 = vsub.s32 %v1475, %v1477
          %v1479 = vrot.slane %v1465, %v1478
          %v1480 = vcombine.high %v1456, 0.0
          %v1481 = vcombine.high %v1463, 0.0
          %v1482 = vcombine.high %v1472, 0.0
          %v1483 = vcombine.high %v1479, 0.0
          %v1484 = vcombine.low %v1388, %v1395
          %v1486 = vunpack.c.l.s4 1983009808
          %v1487 = vunpack.c.0.s8 %v1486
          %v1488 = vlaneseq
          %v1489 = vshrl.u32 %v1488, 7
          %v1490 = vsub.s32 %v1487, %v1489
          %v1491 = vrot.slane %v1484, %v1490
          %v1492 = vcombine.low %v1412, %v1413
          %v1494 = vunpack.c.l.s4 1983009808
          %v1495 = vunpack.c.0.s8 %v1494
          %v1496 = vlaneseq
          %v1497 = vshrl.u32 %v1496, 7
          %v1498 = vsub.s32 %v1495, %v1497
          %v1499 = vrot.slane %v1492, %v1498
          %v1500 = vcombine.low %v1404, %v1411
          %v1502 = vunpack.c.l.s4 1983009808
          %v1503 = vunpack.c.0.s8 %v1502
          %v1504 = vlaneseq
          %v1505 = vshrl.u32 %v1504, 7
          %v1506 = vsub.s32 %v1503, %v1505
          %v1507 = vrot.slane %v1500, %v1506
          %v1508 = vcombine.low %v1414, %v1415
          %v1510 = vunpack.c.l.s4 1983009808
          %v1511 = vunpack.c.0.s8 %v1510
          %v1512 = vlaneseq
          %v1513 = vshrl.u32 %v1512, 7
          %v1514 = vsub.s32 %v1511, %v1513
          %v1515 = vrot.slane %v1508, %v1514
          %v1516 = vcombine.low %v1491, %v1499
          %v1517 = vcombine.high %v1491, %v1499
          %v1519 = vunpack.c.l.s4 1934713408
          %v1520 = vunpack.c.0.s8 %v1519
          %v1521 = vlaneseq
          %v1522 = vshrl.u32 %v1521, 7
          %v1523 = vsub.s32 %v1520, %v1522
          %v1524 = vrot.slane %v1516, %v1523
          %v1526 = vunpack.c.l.s4 1934713408
          %v1527 = vunpack.c.0.s8 %v1526
          %v1528 = vlaneseq
          %v1529 = vshrl.u32 %v1528, 7
          %v1530 = vsub.s32 %v1527, %v1529
          %v1531 = vrot.slane %v1517, %v1530
          %v1532 = vcombine.low %v1507, %v1515
          %v1533 = vcombine.high %v1507, %v1515
          %v1535 = vunpack.c.l.s4 1934713408
          %v1536 = vunpack.c.0.s8 %v1535
          %v1537 = vlaneseq
          %v1538 = vshrl.u32 %v1537, 7
          %v1539 = vsub.s32 %v1536, %v1538
          %v1540 = vrot.slane %v1532, %v1539
          %v1542 = vunpack.c.l.s4 1934713408
          %v1543 = vunpack.c.0.s8 %v1542
          %v1544 = vlaneseq
          %v1545 = vshrl.u32 %v1544, 7
          %v1546 = vsub.s32 %v1543, %v1545
          %v1547 = vrot.slane %v1533, %v1546
          %v1548 = vcombine.low %v1524, %v1540
          %v1549 = vcombine.high %v1524, %v1540
          %v1550 = vcombine.low %v1531, %v1547
          %v1551 = vcombine.high %v1531, %v1547
          %v1552 = vcombine.low %v1456, %v1463
          %v1554 = vunpack.c.l.s4 1983009808
          %v1555 = vunpack.c.0.s8 %v1554
          %v1556 = vlaneseq
          %v1557 = vshrl.u32 %v1556, 7
          %v1558 = vsub.s32 %v1555, %v1557
          %v1559 = vrot.slane %v1552, %v1558
          %v1560 = vcombine.low %v1480, %v1481
          %v1562 = vunpack.c.l.s4 1983009808
          %v1563 = vunpack.c.0.s8 %v1562
          %v1564 = vlaneseq
          %v1565 = vshrl.u32 %v1564, 7
          %v1566 = vsub.s32 %v1563, %v1565
          %v1567 = vrot.slane %v1560, %v1566
          %v1568 = vcombine.low %v1472, %v1479
          %v1570 = vunpack.c.l.s4 1983009808
          %v1571 = vunpack.c.0.s8 %v1570
          %v1572 = vlaneseq
          %v1573 = vshrl.u32 %v1572, 7
          %v1574 = vsub.s32 %v1571, %v1573
          %v1575 = vrot.slane %v1568, %v1574
          %v1576 = vcombine.low %v1482, %v1483
          %v1578 = vunpack.c.l.s4 1983009808
          %v1579 = vunpack.c.0.s8 %v1578
          %v1580 = vlaneseq
          %v1581 = vshrl.u32 %v1580, 7
          %v1582 = vsub.s32 %v1579, %v1581
          %v1583 = vrot.slane %v1576, %v1582
          %v1584 = vcombine.low %v1559, %v1567
          %v1585 = vcombine.high %v1559, %v1567
          %v1587 = vunpack.c.l.s4 1934713408
          %v1588 = vunpack.c.0.s8 %v1587
          %v1589 = vlaneseq
          %v1590 = vshrl.u32 %v1589, 7
          %v1591 = vsub.s32 %v1588, %v1590
          %v1592 = vrot.slane %v1584, %v1591
          %v1594 = vunpack.c.l.s4 1934713408
          %v1595 = vunpack.c.0.s8 %v1594
          %v1596 = vlaneseq
          %v1597 = vshrl.u32 %v1596, 7
          %v1598 = vsub.s32 %v1595, %v1597
          %v1599 = vrot.slane %v1585, %v1598
          %v1600 = vcombine.low %v1575, %v1583
          %v1601 = vcombine.high %v1575, %v1583
          %v1603 = vunpack.c.l.s4 1934713408
          %v1604 = vunpack.c.0.s8 %v1603
          %v1605 = vlaneseq
          %v1606 = vshrl.u32 %v1605, 7
          %v1607 = vsub.s32 %v1604, %v1606
          %v1608 = vrot.slane %v1600, %v1607
          %v1610 = vunpack.c.l.s4 1934713408
          %v1611 = vunpack.c.0.s8 %v1610
          %v1612 = vlaneseq
          %v1613 = vshrl.u32 %v1612, 7
          %v1614 = vsub.s32 %v1611, %v1613
          %v1615 = vrot.slane %v1601, %v1614
          %v1616 = vcombine.low %v1592, %v1608
          %v1617 = vcombine.high %v1592, %v1608
          %v1618 = vcombine.low %v1599, %v1615
          %v1619 = vcombine.high %v1599, %v1615
          %v1620 = vpack.c.bf16 %v1616, %v1548
          %v1621 = vpack.c.bf16 %v1617, %v1549
          %v1622 = vpack.c.bf16 %v1618, %v1550
          %v1623 = vpack.c.bf16 %v1619, %v1551
          %vm1624 = vcmask 64512
          %v1626 = vsel %vm1624, %v1006, 0
          %v1629 = vsel %vm1624, %v1320, 0
          %1631 = vmatprep.subr.bf16.mxu0 0
          %1632 = vmatpush1.bf16.xpose.msra.mxu0 0
          %1633 = vmatprep.subr.bf16.mxu0 0
          %1634 = vmatpush1.bf16.xpose.msra.mxu0 0
          %1635 = vmatprep.subr.bf16.mxu0 0
          %1636 = vmatpush1.bf16.xpose.msra.mxu0 0
          %1637 = vmatprep.subr.bf16.mxu0 0
          %1638 = vmatpush1.bf16.xpose.msra.mxu0 0
          %1639 = vmatprep.subr.bf16.mxu0 0
          %1640 = vmatpush1.bf16.xpose.msra.mxu0 0
          %1641 = vmatprep.subr.bf16.mxu0 0
          %1642 = vmatpush1.bf16.xpose.msra.mxu0 0
          %1643 = vmatprep.subr.bf16.mxu0 0
          %1644 = vmatpush1.bf16.xpose.msra.mxu0 0
          %1645 = vmatprep.subr.bf16.mxu0 0
          %1646 = vmatpush1.bf16.xpose.msra.mxu0 %v1629
          %1647 = vmatprep.subr.bf16.mxu0 0
          %1648 = vmatpush2.bf16.xpose.msra.mxu0 0
          %1649 = vmatprep.subr.bf16.mxu0 0
          %1650 = vmatpush2.bf16.xpose.msra.mxu0 0
          %1651 = vmatprep.subr.bf16.mxu0 0
          %1652 = vmatpush2.bf16.xpose.msra.mxu0 0
          %1653 = vmatprep.subr.bf16.mxu0 0
          %1654 = vmatpush2.bf16.xpose.msra.mxu0 0
          %1655 = vmatprep.subr.bf16.mxu0 0
          %1656 = vmatpush2.bf16.xpose.msra.mxu0 0
          %1657 = vmatprep.subr.bf16.mxu0 0
          %1658 = vmatpush2.bf16.xpose.msra.mxu0 0
          %1659 = vmatprep.subr.bf16.mxu0 0
          %1660 = vmatpush2.bf16.xpose.msra.mxu0 0
          %1661 = vmatprep.subr.bf16.mxu0 0
          %1662 = vmatpush2.bf16.xpose.msra.mxu0 0
          %1663 = vmatprep.mubr.bf16.mxu0 0
          %1664 = vmatmul.mubr.bf16.gmra.mxu0 %v1626
          %v1665 = vpop.f32.mrf.mxu0
          %v1666 = vadd.f32 0.0, %v1665
          %v1667 = vpop.f32.mrf.mxu0
          %v1668 = vpop.f32.mrf.mxu0
          %v1669 = vadd.f32 0.0, %v1668
          %v1670 = vpop.f32.mrf.mxu0
          %1671 = vdwg.mxu0
          %v1673 = vsel %vm1624, %v1007, 0
          %v1676 = vsel %vm1624, %v1321, 0
          %1678 = vmatprep.subr.bf16.mxu0 0
          %1679 = vmatpush1.bf16.xpose.msra.mxu0 0
          %1680 = vmatprep.subr.bf16.mxu0 0
          %1681 = vmatpush1.bf16.xpose.msra.mxu0 0
          %1682 = vmatprep.subr.bf16.mxu0 0
          %1683 = vmatpush1.bf16.xpose.msra.mxu0 0
          %1684 = vmatprep.subr.bf16.mxu0 0
          %1685 = vmatpush1.bf16.xpose.msra.mxu0 0
          %1686 = vmatprep.subr.bf16.mxu0 0
          %1687 = vmatpush1.bf16.xpose.msra.mxu0 0
          %1688 = vmatprep.subr.bf16.mxu0 0
          %1689 = vmatpush1.bf16.xpose.msra.mxu0 0
          %1690 = vmatprep.subr.bf16.mxu0 0
          %1691 = vmatpush1.bf16.xpose.msra.mxu0 0
          %1692 = vmatprep.subr.bf16.mxu0 0
          %1693 = vmatpush1.bf16.xpose.msra.mxu0 %v1676
          %1694 = vmatprep.subr.bf16.mxu0 0
          %1695 = vmatpush2.bf16.xpose.msra.mxu0 0
          %1696 = vmatprep.subr.bf16.mxu0 0
          %1697 = vmatpush2.bf16.xpose.msra.mxu0 0
          %1698 = vmatprep.subr.bf16.mxu0 0
          %1699 = vmatpush2.bf16.xpose.msra.mxu0 0
          %1700 = vmatprep.subr.bf16.mxu0 0
          %1701 = vmatpush2.bf16.xpose.msra.mxu0 0
          %1702 = vmatprep.subr.bf16.mxu0 0
          %1703 = vmatpush2.bf16.xpose.msra.mxu0 0
          %1704 = vmatprep.subr.bf16.mxu0 0
          %1705 = vmatpush2.bf16.xpose.msra.mxu0 0
          %1706 = vmatprep.subr.bf16.mxu0 0
          %1707 = vmatpush2.bf16.xpose.msra.mxu0 0
          %1708 = vmatprep.subr.bf16.mxu0 0
          %1709 = vmatpush2.bf16.xpose.msra.mxu0 0
          %1710 = vmatprep.mubr.bf16.mxu0 0
          %1711 = vmatmul.mubr.bf16.gmra.mxu0 %v1673
          %v1712 = vpop.f32.mrf.mxu0
          %v1713 = vadd.f32 0.0, %v1712
          %v1714 = vpop.f32.mrf.mxu0
          %v1715 = vpop.f32.mrf.mxu0
          %v1716 = vadd.f32 0.0, %v1715
          %v1717 = vpop.f32.mrf.mxu0
          %1718 = vdwg.mxu0
          %v1720 = vsel %vm1624, %v1008, 0
          %v1723 = vsel %vm1624, %v1322, 0
          %1725 = vmatprep.subr.bf16.mxu0 0
          %1726 = vmatpush1.bf16.xpose.msra.mxu0 0
          %1727 = vmatprep.subr.bf16.mxu0 0
          %1728 = vmatpush1.bf16.xpose.msra.mxu0 0
          %1729 = vmatprep.subr.bf16.mxu0 0
          %1730 = vmatpush1.bf16.xpose.msra.mxu0 0
          %1731 = vmatprep.subr.bf16.mxu0 0
          %1732 = vmatpush1.bf16.xpose.msra.mxu0 0
          %1733 = vmatprep.subr.bf16.mxu0 0
          %1734 = vmatpush1.bf16.xpose.msra.mxu0 0
          %1735 = vmatprep.subr.bf16.mxu0 0
          %1736 = vmatpush1.bf16.xpose.msra.mxu0 0
          %1737 = vmatprep.subr.bf16.mxu0 0
          %1738 = vmatpush1.bf16.xpose.msra.mxu0 0
          %1739 = vmatprep.subr.bf16.mxu0 0
          %1740 = vmatpush1.bf16.xpose.msra.mxu0 %v1723
          %1741 = vmatprep.subr.bf16.mxu0 0
          %1742 = vmatpush2.bf16.xpose.msra.mxu0 0
          %1743 = vmatprep.subr.bf16.mxu0 0
          %1744 = vmatpush2.bf16.xpose.msra.mxu0 0
          %1745 = vmatprep.subr.bf16.mxu0 0
          %1746 = vmatpush2.bf16.xpose.msra.mxu0 0
          %1747 = vmatprep.subr.bf16.mxu0 0
          %1748 = vmatpush2.bf16.xpose.msra.mxu0 0
          %1749 = vmatprep.subr.bf16.mxu0 0
          %1750 = vmatpush2.bf16.xpose.msra.mxu0 0
          %1751 = vmatprep.subr.bf16.mxu0 0
          %1752 = vmatpush2.bf16.xpose.msra.mxu0 0
          %1753 = vmatprep.subr.bf16.mxu0 0
          %1754 = vmatpush2.bf16.xpose.msra.mxu0 0
          %1755 = vmatprep.subr.bf16.mxu0 0
          %1756 = vmatpush2.bf16.xpose.msra.mxu0 0
          %1757 = vmatprep.mubr.bf16.mxu0 0
          %1758 = vmatmul.mubr.bf16.gmra.mxu0 %v1720
          %v1759 = vpop.f32.mrf.mxu0
          %v1760 = vadd.f32 0.0, %v1759
          %v1761 = vpop.f32.mrf.mxu0
          %v1762 = vpop.f32.mrf.mxu0
          %v1763 = vadd.f32 0.0, %v1762
          %v1764 = vpop.f32.mrf.mxu0
          %1765 = vdwg.mxu0
          %v1767 = vsel %vm1624, %v1009, 0
          %v1770 = vsel %vm1624, %v1323, 0
          %1772 = vmatprep.subr.bf16.mxu0 0
          %1773 = vmatpush1.bf16.xpose.msra.mxu0 0
          %1774 = vmatprep.subr.bf16.mxu0 0
          %1775 = vmatpush1.bf16.xpose.msra.mxu0 0
          %1776 = vmatprep.subr.bf16.mxu0 0
          %1777 = vmatpush1.bf16.xpose.msra.mxu0 0
          %1778 = vmatprep.subr.bf16.mxu0 0
          %1779 = vmatpush1.bf16.xpose.msra.mxu0 0
          %1780 = vmatprep.subr.bf16.mxu0 0
          %1781 = vmatpush1.bf16.xpose.msra.mxu0 0
          %1782 = vmatprep.subr.bf16.mxu0 0
          %1783 = vmatpush1.bf16.xpose.msra.mxu0 0
          %1784 = vmatprep.subr.bf16.mxu0 0
          %1785 = vmatpush1.bf16.xpose.msra.mxu0 0
          %1786 = vmatprep.subr.bf16.mxu0 0
          %1787 = vmatpush1.bf16.xpose.msra.mxu0 %v1770
          %1788 = vmatprep.subr.bf16.mxu0 0
          %1789 = vmatpush2.bf16.xpose.msra.mxu0 0
          %1790 = vmatprep.subr.bf16.mxu0 0
          %1791 = vmatpush2.bf16.xpose.msra.mxu0 0
          %1792 = vmatprep.subr.bf16.mxu0 0
          %1793 = vmatpush2.bf16.xpose.msra.mxu0 0
          %1794 = vmatprep.subr.bf16.mxu0 0
          %1795 = vmatpush2.bf16.xpose.msra.mxu0 0
          %1796 = vmatprep.subr.bf16.mxu0 0
          %1797 = vmatpush2.bf16.xpose.msra.mxu0 0
          %1798 = vmatprep.subr.bf16.mxu0 0
          %1799 = vmatpush2.bf16.xpose.msra.mxu0 0
          %1800 = vmatprep.subr.bf16.mxu0 0
          %1801 = vmatpush2.bf16.xpose.msra.mxu0 0
          %1802 = vmatprep.subr.bf16.mxu0 0
          %1803 = vmatpush2.bf16.xpose.msra.mxu0 0
          %1804 = vmatprep.mubr.bf16.mxu0 0
          %1805 = vmatmul.mubr.bf16.gmra.mxu0 %v1767
          %v1806 = vpop.f32.mrf.mxu0
          %v1807 = vadd.f32 0.0, %v1806
          %v1808 = vpop.f32.mrf.mxu0
          %v1809 = vpop.f32.mrf.mxu0
          %v1810 = vadd.f32 0.0, %v1809
          %v1811 = vpop.f32.mrf.mxu0
          %1812 = vdwg.mxu0
          %vm1813 = vcmask 130048
          %v1814 = vsel %vm1813, %v1666, -inf
          %1815 = vmax.xlane.f32.xlu0 %v1814
          %v1816 = vpop.xlane.xlu0 %1815
          %v1817 = vsel %vm1813, %v1669, -inf
          %1818 = vmax.xlane.f32.xlu0 %v1817
          %v1819 = vpop.xlane.xlu0 %1818
          %v1820 = vsel %vm1813, %v1713, -inf
          %1821 = vmax.xlane.f32.xlu0 %v1820
          %v1822 = vpop.xlane.xlu0 %1821
          %v1823 = vsel %vm1813, %v1716, -inf
          %1824 = vmax.xlane.f32.xlu0 %v1823
          %v1825 = vpop.xlane.xlu0 %1824
          %v1826 = vsel %vm1813, %v1760, -inf
          %1827 = vmax.xlane.f32.xlu0 %v1826
          %v1828 = vpop.xlane.xlu0 %1827
          %v1829 = vsel %vm1813, %v1763, -inf
          %1830 = vmax.xlane.f32.xlu0 %v1829
          %v1831 = vpop.xlane.xlu0 %1830
          %v1832 = vsel %vm1813, %v1807, -inf
          %1833 = vmax.xlane.f32.xlu0 %v1832
          %v1834 = vpop.xlane.xlu0 %1833
          %v1835 = vsel %vm1813, %v1810, -inf
          %1836 = vmax.xlane.f32.xlu0 %v1835
          %v1837 = vpop.xlane.xlu0 %1836
          %v1838 = vsub.f32 %v1666, %v1816
          %v1839 = vsub.f32 %v1669, %v1819
          %v1840 = vsub.f32 %v1713, %v1822
          %v1841 = vsub.f32 %v1716, %v1825
          %v1842 = vsub.f32 %v1760, %v1828
          %v1843 = vsub.f32 %v1763, %v1831
          %v1844 = vsub.f32 %v1807, %v1834
          %v1845 = vsub.f32 %v1810, %v1837
          %v1846 = vmul.f32 %v1838, 1.442695
          %v1847 = vpow.pop %v1846
          %v1848 = vmul.f32 %v1839, 1.442695
          %v1849 = vpow.pop %v1848
          %v1850 = vmul.f32 %v1840, 1.442695
          %v1851 = vpow.pop %v1850
          %v1852 = vmul.f32 %v1841, 1.442695
          %v1853 = vpow.pop %v1852
          %v1854 = vmul.f32 %v1842, 1.442695
          %v1855 = vpow.pop %v1854
          %v1856 = vmul.f32 %v1843, 1.442695
          %v1857 = vpow.pop %v1856
          %v1858 = vmul.f32 %v1844, 1.442695
          %v1859 = vpow.pop %v1858
          %v1860 = vmul.f32 %v1845, 1.442695
          %v1861 = vpow.pop %v1860
          %v1862 = vsel %vm1813, %v1847, 0.0
          %1863 = vadd.xlane.f32.xlu0 %v1862
          %v1864 = vpop.xlane.xlu0 %1863
          %v1865 = vsel %vm1813, %v1849, 0.0
          %1866 = vadd.xlane.f32.xlu0 %v1865
          %v1867 = vpop.xlane.xlu0 %1866
          %v1868 = vsel %vm1813, %v1851, 0.0
          %1869 = vadd.xlane.f32.xlu0 %v1868
          %v1870 = vpop.xlane.xlu0 %1869
          %v1871 = vsel %vm1813, %v1853, 0.0
          %1872 = vadd.xlane.f32.xlu0 %v1871
          %v1873 = vpop.xlane.xlu0 %1872
          %v1874 = vsel %vm1813, %v1855, 0.0
          %1875 = vadd.xlane.f32.xlu0 %v1874
          %v1876 = vpop.xlane.xlu0 %1875
          %v1877 = vsel %vm1813, %v1857, 0.0
          %1878 = vadd.xlane.f32.xlu0 %v1877
          %v1879 = vpop.xlane.xlu0 %1878
          %v1880 = vsel %vm1813, %v1859, 0.0
          %1881 = vadd.xlane.f32.xlu0 %v1880
          %v1882 = vpop.xlane.xlu0 %1881
          %v1883 = vsel %vm1813, %v1861, 0.0
          %1884 = vadd.xlane.f32.xlu0 %v1883
          %v1885 = vpop.xlane.xlu0 %1884
          %v1886 = vrcp.pop %v1864
          %v1887 = vrcp.pop %v1867
          %v1888 = vrcp.pop %v1870
          %v1889 = vrcp.pop %v1873
          %v1890 = vrcp.pop %v1876
          %v1891 = vrcp.pop %v1879
          %v1892 = vrcp.pop %v1882
          %v1893 = vrcp.pop %v1885
          %v1894 = vmul.f32 %v1847, %v1886
          %v1895 = vmul.f32 %v1849, %v1887
          %v1896 = vmul.f32 %v1851, %v1888
          %v1897 = vmul.f32 %v1853, %v1889
          %v1898 = vmul.f32 %v1855, %v1890
          %v1899 = vmul.f32 %v1857, %v1891
          %v1900 = vmul.f32 %v1859, %v1892
          %v1901 = vmul.f32 %v1861, %v1893
          %v1902 = vpack.c.bf16 %v1895, %v1894
          %v1903 = vpack.c.bf16 %v1897, %v1896
          %v1904 = vpack.c.bf16 %v1899, %v1898
          %v1905 = vpack.c.bf16 %v1901, %v1900
          %v1907 = vsel %vm1813, %v1902, 0
          %1909 = vmatprep.subr.bf16.mxu0 0
          %1910 = vmatpush1.bf16.msra.mxu0 0
          %1911 = vmatprep.subr.bf16.mxu0 0
          %1912 = vmatpush1.bf16.msra.mxu0 0
          %1913 = vmatprep.subr.bf16.mxu0 0
          %1914 = vmatpush1.bf16.msra.mxu0 0
          %1915 = vmatprep.subr.bf16.mxu0 0
          %1916 = vmatpush1.bf16.msra.mxu0 0
          %1917 = vmatprep.subr.bf16.mxu0 0
          %1918 = vmatpush1.bf16.msra.mxu0 0
          %1919 = vmatprep.subr.bf16.mxu0 0
          %1920 = vmatpush1.bf16.msra.mxu0 0
          %1921 = vmatprep.subr.bf16.mxu0 0
          %1922 = vmatpush1.bf16.msra.mxu0 0
          %1923 = vmatprep.subr.bf16.mxu0 0
          %1924 = vmatpush1.bf16.msra.mxu0 %v1620
          %1925 = vmatprep.subr.bf16.mxu0 0
          %1926 = vmatpush2.bf16.msra.mxu0 0
          %1927 = vmatprep.subr.bf16.mxu0 0
          %1928 = vmatpush2.bf16.msra.mxu0 0
          %1929 = vmatprep.subr.bf16.mxu0 0
          %1930 = vmatpush2.bf16.msra.mxu0 0
          %1931 = vmatprep.subr.bf16.mxu0 0
          %1932 = vmatpush2.bf16.msra.mxu0 0
          %1933 = vmatprep.subr.bf16.mxu0 0
          %1934 = vmatpush2.bf16.msra.mxu0 0
          %1935 = vmatprep.subr.bf16.mxu0 0
          %1936 = vmatpush2.bf16.msra.mxu0 0
          %1937 = vmatprep.subr.bf16.mxu0 0
          %1938 = vmatpush2.bf16.msra.mxu0 0
          %1939 = vmatprep.subr.bf16.mxu0 0
          %1940 = vmatpush2.bf16.msra.mxu0 0
          %1941 = vmatprep.mubr.bf16.mxu0 0
          %1942 = vmatmul.mubr.bf16.gmra.mxu0 %v1907
          %v1943 = vpop.f32.mrf.mxu0
          %v1944 = vadd.f32 0.0, %v1943
          %v1945 = vpop.f32.mrf.mxu0
          %v1946 = vpop.f32.mrf.mxu0
          %v1947 = vadd.f32 0.0, %v1946
          %v1948 = vpop.f32.mrf.mxu0
          %1949 = vdwg.mxu0
          %v1951 = vsel %vm1813, %v1903, 0
          %1953 = vmatprep.subr.bf16.mxu0 0
          %1954 = vmatpush1.bf16.msra.mxu0 0
          %1955 = vmatprep.subr.bf16.mxu0 0
          %1956 = vmatpush1.bf16.msra.mxu0 0
          %1957 = vmatprep.subr.bf16.mxu0 0
          %1958 = vmatpush1.bf16.msra.mxu0 0
          %1959 = vmatprep.subr.bf16.mxu0 0
          %1960 = vmatpush1.bf16.msra.mxu0 0
          %1961 = vmatprep.subr.bf16.mxu0 0
          %1962 = vmatpush1.bf16.msra.mxu0 0
          %1963 = vmatprep.subr.bf16.mxu0 0
          %1964 = vmatpush1.bf16.msra.mxu0 0
          %1965 = vmatprep.subr.bf16.mxu0 0
          %1966 = vmatpush1.bf16.msra.mxu0 0
          %1967 = vmatprep.subr.bf16.mxu0 0
          %1968 = vmatpush1.bf16.msra.mxu0 %v1621
          %1969 = vmatprep.subr.bf16.mxu0 0
          %1970 = vmatpush2.bf16.msra.mxu0 0
          %1971 = vmatprep.subr.bf16.mxu0 0
          %1972 = vmatpush2.bf16.msra.mxu0 0
          %1973 = vmatprep.subr.bf16.mxu0 0
          %1974 = vmatpush2.bf16.msra.mxu0 0
          %1975 = vmatprep.subr.bf16.mxu0 0
          %1976 = vmatpush2.bf16.msra.mxu0 0
          %1977 = vmatprep.subr.bf16.mxu0 0
          %1978 = vmatpush2.bf16.msra.mxu0 0
          %1979 = vmatprep.subr.bf16.mxu0 0
          %1980 = vmatpush2.bf16.msra.mxu0 0
          %1981 = vmatprep.subr.bf16.mxu0 0
          %1982 = vmatpush2.bf16.msra.mxu0 0
          %1983 = vmatprep.subr.bf16.mxu0 0
          %1984 = vmatpush2.bf16.msra.mxu0 0
          %1985 = vmatprep.mubr.bf16.mxu0 0
          %1986 = vmatmul.mubr.bf16.gmra.mxu0 %v1951
          %v1987 = vpop.f32.mrf.mxu0
          %v1988 = vadd.f32 0.0, %v1987
          %v1989 = vpop.f32.mrf.mxu0
          %v1990 = vpop.f32.mrf.mxu0
          %v1991 = vadd.f32 0.0, %v1990
          %v1992 = vpop.f32.mrf.mxu0
          %1993 = vdwg.mxu0
          %v1995 = vsel %vm1813, %v1904, 0
          %1997 = vmatprep.subr.bf16.mxu0 0
          %1998 = vmatpush1.bf16.msra.mxu0 0
          %1999 = vmatprep.subr.bf16.mxu0 0
          %2000 = vmatpush1.bf16.msra.mxu0 0
          %2001 = vmatprep.subr.bf16.mxu0 0
          %2002 = vmatpush1.bf16.msra.mxu0 0
          %2003 = vmatprep.subr.bf16.mxu0 0
          %2004 = vmatpush1.bf16.msra.mxu0 0
          %2005 = vmatprep.subr.bf16.mxu0 0
          %2006 = vmatpush1.bf16.msra.mxu0 0
          %2007 = vmatprep.subr.bf16.mxu0 0
          %2008 = vmatpush1.bf16.msra.mxu0 0
          %2009 = vmatprep.subr.bf16.mxu0 0
          %2010 = vmatpush1.bf16.msra.mxu0 0
          %2011 = vmatprep.subr.bf16.mxu0 0
          %2012 = vmatpush1.bf16.msra.mxu0 %v1622
          %2013 = vmatprep.subr.bf16.mxu0 0
          %2014 = vmatpush2.bf16.msra.mxu0 0
          %2015 = vmatprep.subr.bf16.mxu0 0
          %2016 = vmatpush2.bf16.msra.mxu0 0
          %2017 = vmatprep.subr.bf16.mxu0 0
          %2018 = vmatpush2.bf16.msra.mxu0 0
          %2019 = vmatprep.subr.bf16.mxu0 0
          %2020 = vmatpush2.bf16.msra.mxu0 0
          %2021 = vmatprep.subr.bf16.mxu0 0
          %2022 = vmatpush2.bf16.msra.mxu0 0
          %2023 = vmatprep.subr.bf16.mxu0 0
          %2024 = vmatpush2.bf16.msra.mxu0 0
          %2025 = vmatprep.subr.bf16.mxu0 0
          %2026 = vmatpush2.bf16.msra.mxu0 0
          %2027 = vmatprep.subr.bf16.mxu0 0
          %2028 = vmatpush2.bf16.msra.mxu0 0
          %2029 = vmatprep.mubr.bf16.mxu0 0
          %2030 = vmatmul.mubr.bf16.gmra.mxu0 %v1995
          %v2031 = vpop.f32.mrf.mxu0
          %v2032 = vadd.f32 0.0, %v2031
          %v2033 = vpop.f32.mrf.mxu0
          %v2034 = vpop.f32.mrf.mxu0
          %v2035 = vadd.f32 0.0, %v2034
          %v2036 = vpop.f32.mrf.mxu0
          %2037 = vdwg.mxu0
          %v2039 = vsel %vm1813, %v1905, 0
          %2041 = vmatprep.subr.bf16.mxu0 0
          %2042 = vmatpush1.bf16.msra.mxu0 0
          %2043 = vmatprep.subr.bf16.mxu0 0
          %2044 = vmatpush1.bf16.msra.mxu0 0
          %2045 = vmatprep.subr.bf16.mxu0 0
          %2046 = vmatpush1.bf16.msra.mxu0 0
          %2047 = vmatprep.subr.bf16.mxu0 0
          %2048 = vmatpush1.bf16.msra.mxu0 0
          %2049 = vmatprep.subr.bf16.mxu0 0
          %2050 = vmatpush1.bf16.msra.mxu0 0
          %2051 = vmatprep.subr.bf16.mxu0 0
          %2052 = vmatpush1.bf16.msra.mxu0 0
          %2053 = vmatprep.subr.bf16.mxu0 0
          %2054 = vmatpush1.bf16.msra.mxu0 0
          %2055 = vmatprep.subr.bf16.mxu0 0
          %2056 = vmatpush1.bf16.msra.mxu0 %v1623
          %2057 = vmatprep.subr.bf16.mxu0 0
          %2058 = vmatpush2.bf16.msra.mxu0 0
          %2059 = vmatprep.subr.bf16.mxu0 0
          %2060 = vmatpush2.bf16.msra.mxu0 0
          %2061 = vmatprep.subr.bf16.mxu0 0
          %2062 = vmatpush2.bf16.msra.mxu0 0
          %2063 = vmatprep.subr.bf16.mxu0 0
          %2064 = vmatpush2.bf16.msra.mxu0 0
          %2065 = vmatprep.subr.bf16.mxu0 0
          %2066 = vmatpush2.bf16.msra.mxu0 0
          %2067 = vmatprep.subr.bf16.mxu0 0
          %2068 = vmatpush2.bf16.msra.mxu0 0
          %2069 = vmatprep.subr.bf16.mxu0 0
          %2070 = vmatpush2.bf16.msra.mxu0 0
          %2071 = vmatprep.subr.bf16.mxu0 0
          %2072 = vmatpush2.bf16.msra.mxu0 0
          %2073 = vmatprep.mubr.bf16.mxu0 0
          %2074 = vmatmul.mubr.bf16.gmra.mxu0 %v2039
          %v2075 = vpop.f32.mrf.mxu0
          %v2076 = vadd.f32 0.0, %v2075
          %v2077 = vpop.f32.mrf.mxu0
          %v2078 = vpop.f32.mrf.mxu0
          %v2079 = vadd.f32 0.0, %v2078
          %v2080 = vpop.f32.mrf.mxu0
          %2081 = vdwg.mxu0
          %v2082 = vcombine.low %v1944, %v2032
          %v2083 = vcombine.high %v1944, %v2032
          %v2085 = vunpack.c.l.s4 1983009808
          %v2086 = vunpack.c.0.s8 %v2085
          %v2087 = vlaneseq
          %v2088 = vshrl.u32 %v2087, 7
          %v2089 = vsub.s32 %v2086, %v2088
          %v2090 = vrot.slane %v2082, %v2089
          %v2092 = vunpack.c.l.s4 1983009808
          %v2093 = vunpack.c.0.s8 %v2092
          %v2094 = vlaneseq
          %v2095 = vshrl.u32 %v2094, 7
          %v2096 = vsub.s32 %v2093, %v2095
          %v2097 = vrot.slane %v2083, %v2096
          %v2098 = vcombine.low %v1988, %v2076
          %v2099 = vcombine.high %v1988, %v2076
          %v2101 = vunpack.c.l.s4 1983009808
          %v2102 = vunpack.c.0.s8 %v2101
          %v2103 = vlaneseq
          %v2104 = vshrl.u32 %v2103, 7
          %v2105 = vsub.s32 %v2102, %v2104
          %v2106 = vrot.slane %v2098, %v2105
          %v2108 = vunpack.c.l.s4 1983009808
          %v2109 = vunpack.c.0.s8 %v2108
          %v2110 = vlaneseq
          %v2111 = vshrl.u32 %v2110, 7
          %v2112 = vsub.s32 %v2109, %v2111
          %v2113 = vrot.slane %v2099, %v2112
          %v2114 = vcombine.low %v2090, %v2106
          %v2115 = vcombine.high %v2090, %v2106
          %v2117 = vunpack.c.l.s4 1934713408
          %v2118 = vunpack.c.0.s8 %v2117
          %v2119 = vlaneseq
          %v2120 = vshrl.u32 %v2119, 7
          %v2121 = vsub.s32 %v2118, %v2120
          %v2122 = vrot.slane %v2114, %v2121
          %v2124 = vunpack.c.l.s4 1934713408
          %v2125 = vunpack.c.0.s8 %v2124
          %v2126 = vlaneseq
          %v2127 = vshrl.u32 %v2126, 7
          %v2128 = vsub.s32 %v2125, %v2127
          %v2129 = vrot.slane %v2115, %v2128
          %v2130 = vcombine.low %v2097, %v2113
          %v2131 = vcombine.high %v2097, %v2113
          %v2133 = vunpack.c.l.s4 1934713408
          %v2134 = vunpack.c.0.s8 %v2133
          %v2135 = vlaneseq
          %v2136 = vshrl.u32 %v2135, 7
          %v2137 = vsub.s32 %v2134, %v2136
          %v2138 = vrot.slane %v2130, %v2137
          %v2140 = vunpack.c.l.s4 1934713408
          %v2141 = vunpack.c.0.s8 %v2140
          %v2142 = vlaneseq
          %v2143 = vshrl.u32 %v2142, 7
          %v2144 = vsub.s32 %v2141, %v2143
          %v2145 = vrot.slane %v2131, %v2144
          %v2146 = vcombine.high %v2122, 0.0
          %v2147 = vcombine.high %v2129, 0.0
          %v2148 = vcombine.high %v2138, 0.0
          %v2149 = vcombine.high %v2145, 0.0
          %v2150 = vcombine.low %v1947, %v2035
          %v2151 = vcombine.high %v1947, %v2035
          %v2153 = vunpack.c.l.s4 1983009808
          %v2154 = vunpack.c.0.s8 %v2153
          %v2155 = vlaneseq
          %v2156 = vshrl.u32 %v2155, 7
          %v2157 = vsub.s32 %v2154, %v2156
          %v2158 = vrot.slane %v2150, %v2157
          %v2160 = vunpack.c.l.s4 1983009808
          %v2161 = vunpack.c.0.s8 %v2160
          %v2162 = vlaneseq
          %v2163 = vshrl.u32 %v2162, 7
          %v2164 = vsub.s32 %v2161, %v2163
          %v2165 = vrot.slane %v2151, %v2164
          %v2166 = vcombine.low %v1991, %v2079
          %v2167 = vcombine.high %v1991, %v2079
          %v2169 = vunpack.c.l.s4 1983009808
          %v2170 = vunpack.c.0.s8 %v2169
          %v2171 = vlaneseq
          %v2172 = vshrl.u32 %v2171, 7
          %v2173 = vsub.s32 %v2170, %v2172
          %v2174 = vrot.slane %v2166, %v2173
          %v2176 = vunpack.c.l.s4 1983009808
          %v2177 = vunpack.c.0.s8 %v2176
          %v2178 = vlaneseq
          %v2179 = vshrl.u32 %v2178, 7
          %v2180 = vsub.s32 %v2177, %v2179
          %v2181 = vrot.slane %v2167, %v2180
          %v2182 = vcombine.low %v2158, %v2174
          %v2183 = vcombine.high %v2158, %v2174
          %v2185 = vunpack.c.l.s4 1934713408
          %v2186 = vunpack.c.0.s8 %v2185
          %v2187 = vlaneseq
          %v2188 = vshrl.u32 %v2187, 7
          %v2189 = vsub.s32 %v2186, %v2188
          %v2190 = vrot.slane %v2182, %v2189
          %v2192 = vunpack.c.l.s4 1934713408
          %v2193 = vunpack.c.0.s8 %v2192
          %v2194 = vlaneseq
          %v2195 = vshrl.u32 %v2194, 7
          %v2196 = vsub.s32 %v2193, %v2195
          %v2197 = vrot.slane %v2183, %v2196
          %v2198 = vcombine.low %v2165, %v2181
          %v2199 = vcombine.high %v2165, %v2181
          %v2201 = vunpack.c.l.s4 1934713408
          %v2202 = vunpack.c.0.s8 %v2201
          %v2203 = vlaneseq
          %v2204 = vshrl.u32 %v2203, 7
          %v2205 = vsub.s32 %v2202, %v2204
          %v2206 = vrot.slane %v2198, %v2205
          %v2208 = vunpack.c.l.s4 1934713408
          %v2209 = vunpack.c.0.s8 %v2208
          %v2210 = vlaneseq
          %v2211 = vshrl.u32 %v2210, 7
          %v2212 = vsub.s32 %v2209, %v2211
          %v2213 = vrot.slane %v2199, %v2212
          %v2214 = vcombine.high %v2190, 0.0
          %v2215 = vcombine.high %v2197, 0.0
          %v2216 = vcombine.high %v2206, 0.0
          %v2217 = vcombine.high %v2213, 0.0
          %v2218 = vcombine.low %v2122, %v2129
          %v2220 = vunpack.c.l.s4 1983009808
          %v2221 = vunpack.c.0.s8 %v2220
          %v2222 = vlaneseq
          %v2223 = vshrl.u32 %v2222, 7
          %v2224 = vsub.s32 %v2221, %v2223
          %v2225 = vrot.slane %v2218, %v2224
          %v2226 = vcombine.low %v2146, %v2147
          %v2228 = vunpack.c.l.s4 1983009808
          %v2229 = vunpack.c.0.s8 %v2228
          %v2230 = vlaneseq
          %v2231 = vshrl.u32 %v2230, 7
          %v2232 = vsub.s32 %v2229, %v2231
          %v2233 = vrot.slane %v2226, %v2232
          %v2234 = vcombine.low %v2138, %v2145
          %v2236 = vunpack.c.l.s4 1983009808
          %v2237 = vunpack.c.0.s8 %v2236
          %v2238 = vlaneseq
          %v2239 = vshrl.u32 %v2238, 7
          %v2240 = vsub.s32 %v2237, %v2239
          %v2241 = vrot.slane %v2234, %v2240
          %v2242 = vcombine.low %v2148, %v2149
          %v2244 = vunpack.c.l.s4 1983009808
          %v2245 = vunpack.c.0.s8 %v2244
          %v2246 = vlaneseq
          %v2247 = vshrl.u32 %v2246, 7
          %v2248 = vsub.s32 %v2245, %v2247
          %v2249 = vrot.slane %v2242, %v2248
          %v2250 = vcombine.low %v2225, %v2233
          %v2251 = vcombine.high %v2225, %v2233
          %v2253 = vunpack.c.l.s4 1934713408
          %v2254 = vunpack.c.0.s8 %v2253
          %v2255 = vlaneseq
          %v2256 = vshrl.u32 %v2255, 7
          %v2257 = vsub.s32 %v2254, %v2256
          %v2258 = vrot.slane %v2250, %v2257
          %v2260 = vunpack.c.l.s4 1934713408
          %v2261 = vunpack.c.0.s8 %v2260
          %v2262 = vlaneseq
          %v2263 = vshrl.u32 %v2262, 7
          %v2264 = vsub.s32 %v2261, %v2263
          %v2265 = vrot.slane %v2251, %v2264
          %v2266 = vcombine.low %v2241, %v2249
          %v2267 = vcombine.high %v2241, %v2249
          %v2269 = vunpack.c.l.s4 1934713408
          %v2270 = vunpack.c.0.s8 %v2269
          %v2271 = vlaneseq
          %v2272 = vshrl.u32 %v2271, 7
          %v2273 = vsub.s32 %v2270, %v2272
          %v2274 = vrot.slane %v2266, %v2273
          %v2276 = vunpack.c.l.s4 1934713408
          %v2277 = vunpack.c.0.s8 %v2276
          %v2278 = vlaneseq
          %v2279 = vshrl.u32 %v2278, 7
          %v2280 = vsub.s32 %v2277, %v2279
          %v2281 = vrot.slane %v2267, %v2280
          %v2282 = vcombine.low %v2258, %v2274
          %v2283 = vcombine.high %v2258, %v2274
          %v2284 = vcombine.low %v2265, %v2281
          %v2285 = vcombine.high %v2265, %v2281
          %v2286 = vcombine.low %v2190, %v2197
          %v2288 = vunpack.c.l.s4 1983009808
          %v2289 = vunpack.c.0.s8 %v2288
          %v2290 = vlaneseq
          %v2291 = vshrl.u32 %v2290, 7
          %v2292 = vsub.s32 %v2289, %v2291
          %v2293 = vrot.slane %v2286, %v2292
          %v2294 = vcombine.low %v2214, %v2215
          %v2296 = vunpack.c.l.s4 1983009808
          %v2297 = vunpack.c.0.s8 %v2296
          %v2298 = vlaneseq
          %v2299 = vshrl.u32 %v2298, 7
          %v2300 = vsub.s32 %v2297, %v2299
          %v2301 = vrot.slane %v2294, %v2300
          %v2302 = vcombine.low %v2206, %v2213
          %v2304 = vunpack.c.l.s4 1983009808
          %v2305 = vunpack.c.0.s8 %v2304
          %v2306 = vlaneseq
          %v2307 = vshrl.u32 %v2306, 7
          %v2308 = vsub.s32 %v2305, %v2307
          %v2309 = vrot.slane %v2302, %v2308
          %v2310 = vcombine.low %v2216, %v2217
          %v2312 = vunpack.c.l.s4 1983009808
          %v2313 = vunpack.c.0.s8 %v2312
          %v2314 = vlaneseq
          %v2315 = vshrl.u32 %v2314, 7
          %v2316 = vsub.s32 %v2313, %v2315
          %v2317 = vrot.slane %v2310, %v2316
          %v2318 = vcombine.low %v2293, %v2301
          %v2319 = vcombine.high %v2293, %v2301
          %v2321 = vunpack.c.l.s4 1934713408
          %v2322 = vunpack.c.0.s8 %v2321
          %v2323 = vlaneseq
          %v2324 = vshrl.u32 %v2323, 7
          %v2325 = vsub.s32 %v2322, %v2324
          %v2326 = vrot.slane %v2318, %v2325
          %v2328 = vunpack.c.l.s4 1934713408
          %v2329 = vunpack.c.0.s8 %v2328
          %v2330 = vlaneseq
          %v2331 = vshrl.u32 %v2330, 7
          %v2332 = vsub.s32 %v2329, %v2331
          %v2333 = vrot.slane %v2319, %v2332
          %v2334 = vcombine.low %v2309, %v2317
          %v2335 = vcombine.high %v2309, %v2317
          %v2337 = vunpack.c.l.s4 1934713408
          %v2338 = vunpack.c.0.s8 %v2337
          %v2339 = vlaneseq
          %v2340 = vshrl.u32 %v2339, 7
          %v2341 = vsub.s32 %v2338, %v2340
          %v2342 = vrot.slane %v2334, %v2341
          %v2344 = vunpack.c.l.s4 1934713408
          %v2345 = vunpack.c.0.s8 %v2344
          %v2346 = vlaneseq
          %v2347 = vshrl.u32 %v2346, 7
          %v2348 = vsub.s32 %v2345, %v2347
          %v2349 = vrot.slane %v2335, %v2348
          %v2350 = vcombine.low %v2326, %v2342
          %v2351 = vcombine.high %v2326, %v2342
          %v2352 = vcombine.low %v2333, %v2349
          %v2353 = vcombine.high %v2333, %v2349
          %2356 = vrot.lane.b32.xlu0 %v2283, 8
          %v2357 = vpop.permute.xlu0 %2356
          %2358 = vrot.lane.b32.xlu0 %v2351, 8
          %v2359 = vpop.permute.xlu0 %2358
          %2364 = vrot.lane.b32.xlu0 %v2284, 16
          %v2365 = vpop.permute.xlu0 %2364
          %2366 = vrot.lane.b32.xlu0 %v2352, 16
          %v2367 = vpop.permute.xlu0 %2366
          %2372 = vrot.lane.b32.xlu0 %v2285, 24
          %v2373 = vpop.permute.xlu0 %2372
          %2374 = vrot.lane.b32.xlu0 %v2353, 24
          %v2375 = vpop.permute.xlu0 %2374
          %v2378 = vsel %vm1624, %v2282, %v2357
          %v2379 = vsel %vm1624, %v2350, %v2359
          %v2380 = vsel %vm1813, %v2378, %v2365
          %v2381 = vsel %vm1813, %v2379, %v2367
          %vm2382 = vcmask 195584
          %v2383 = vsel %vm2382, %v2380, %v2373
          %v2384 = vsel %vm2382, %v2381, %v2375
          %v2385 = vpack.c.bf16 %v2384, %v2383
          %v2386 = vld [vmem:[#allocation7] sm:$0xf]
          %v2387 = vld [vmem:[#allocation7 + $0x4] sm:$0xf]
          %v2388 = vld [vmem:[#allocation7 + $0x8] sm:$0xf]
          %v2389 = vld [vmem:[#allocation7 + $0xc] sm:$0xf]
          %v2390 = vld [vmem:[%s5] sm:$0x1]
          %v2392 = vlaneseq
          %v2393 = vshrl.u32 %v2392, 7
          %v2394 = vsub.s32 0, %v2393
          %v2395 = vrot.slane %v2390, %v2394
          %v2401 = vunpack.c.l.b16 %v2386
          %v2402 = vunpack.c.l.b16 %v2387
          %v2403 = vunpack.c.l.b16 %v2388
          %v2404 = vunpack.c.l.b16 %v2389
          %v2405 = vpack.c.b16 %v2402, %v2401
          %v2406 = vpack.c.b16 %v2404, %v2403
          %v2410 = vsel %vm667, %v2385, 0
          %2412 = vmatprep.subr.bf16.mxu0 0
          %2413 = vmatpush1.bf16.msra.mxu0 0
          %2414 = vmatprep.subr.bf16.mxu0 0
          %2415 = vmatpush1.bf16.msra.mxu0 0
          %2416 = vmatprep.subr.bf16.mxu0 0
          %2417 = vmatpush1.bf16.msra.mxu0 0
          %2418 = vmatprep.subr.bf16.mxu0 0
          %2419 = vmatpush1.bf16.msra.mxu0 0
          %2420 = vmatprep.subr.bf16.mxu0 0
          %2421 = vmatpush1.bf16.msra.mxu0 0
          %2422 = vmatprep.subr.bf16.mxu0 0
          %2423 = vmatpush1.bf16.msra.mxu0 0
          %2424 = vmatprep.subr.bf16.mxu0 0
          %2425 = vmatpush1.bf16.msra.mxu0 %v2406
          %2426 = vmatprep.subr.bf16.mxu0 0
          %2427 = vmatpush1.bf16.msra.mxu0 %v2405
          %2428 = vmatprep.subr.bf16.mxu0 0
          %2429 = vmatpush2.bf16.msra.mxu0 0
          %2430 = vmatprep.subr.bf16.mxu0 0
          %2431 = vmatpush2.bf16.msra.mxu0 0
          %2432 = vmatprep.subr.bf16.mxu0 0
          %2433 = vmatpush2.bf16.msra.mxu0 0
          %2434 = vmatprep.subr.bf16.mxu0 0
          %2435 = vmatpush2.bf16.msra.mxu0 0
          %2436 = vmatprep.subr.bf16.mxu0 0
          %2437 = vmatpush2.bf16.msra.mxu0 0
          %2438 = vmatprep.subr.bf16.mxu0 0
          %2439 = vmatpush2.bf16.msra.mxu0 0
          %2440 = vmatprep.subr.bf16.mxu0 0
          %2441 = vmatpush2.bf16.msra.mxu0 0
          %2442 = vmatprep.subr.bf16.mxu0 0
          %2443 = vmatpush2.bf16.msra.mxu0 0
          %2444 = vmatprep.mubr.bf16.mxu0 0
          %2445 = vmatmul.mubr.bf16.gmra.mxu0 %v2410
          %v2446 = vpop.f32.mrf.mxu0
          %v2447 = vadd.f32 %v2395, %v2446
          %v2448 = vpop.f32.mrf.mxu0
          %v2449 = vpop.f32.mrf.mxu0
          %v2450 = vadd.f32 %v2395, %v2449
          %v2451 = vpop.f32.mrf.mxu0
          %2452 = vdwg.mxu0
          %v2453 = vadd.f32 %v2447, %v641
          %v2454 = vadd.f32 %v2450, %v642
          %v2455 = vld [vmem:[#allocation9] sm:$0x1]
          %v2456 = vld [vmem:[#allocation10] sm:$0x1]
          %v2457 = vsel %vm667, %v2453, 0.0
          %2458 = vadd.xlane.f32.xlu0 %v2457
          %v2459 = vpop.xlane.xlu0 %2458
          %v2460 = vsel %vm667, %v2454, 0.0
          %2461 = vadd.xlane.f32.xlu0 %v2460
          %v2462 = vpop.xlane.xlu0 %2461
          %v2463 = vrcp.pop 32.0
          %v2464 = vmul.f32 %v2459, %v2463
          %v2465 = vmul.f32 %v2462, %v2463
          %v2466 = vsub.f32 %v2453, %v2464
          %v2467 = vsub.f32 %v2454, %v2465
          %v2468 = vmul.f32 %v2466, %v2466
          %v2469 = vmul.f32 %v2467, %v2467
          %v2470 = vsel %vm667, %v2468, 0.0
          %2471 = vadd.xlane.f32.xlu0 %v2470
          %v2472 = vpop.xlane.xlu0 %2471
          %v2473 = vsel %vm667, %v2469, 0.0
          %2474 = vadd.xlane.f32.xlu0 %v2473
          %v2475 = vpop.xlane.xlu0 %2474
          %v2476 = vmul.f32 %v2472, %v2463
          %v2477 = vmul.f32 %v2475, %v2463
          %v2478 = vadd.f32 %v2476, 1e-12
          %v2479 = vadd.f32 %v2477, 1e-12
          %v2480 = vrsqrt.pop %v2478
          %v2481 = vrsqrt.pop %v2479
          %v2482 = vmul.f32 %v2466, %v2480
          %v2483 = vmul.f32 %v2467, %v2481
          %v2485 = vlaneseq
          %v2486 = vshrl.u32 %v2485, 7
          %v2487 = vsub.s32 0, %v2486
          %v2488 = vrot.slane %v2455, %v2487
          %v2490 = vmul.f32 %v2482, %v2488
          %v2491 = vmul.f32 %v2483, %v2488
          %v2493 = vlaneseq
          %v2494 = vshrl.u32 %v2493, 7
          %v2495 = vsub.s32 0, %v2494
          %v2496 = vrot.slane %v2456, %v2495
          %v2498 = vadd.f32 %v2490, %v2496
          %v2499 = vadd.f32 %v2491, %v2496
          %2500 = vst.msk [vmem:[#allocation2] sm:$0xff] %vm667, %v2498
          %2501 = vst.msk [vmem:[#allocation2 + $0x8] sm:$0xff] %vm667, %v2499
          %2502 = vst.msk [vmem:[#allocation3] sm:$0xff] %vm667, 0.0
          %2503 = vst.msk [vmem:[#allocation3 + $0x8] sm:$0xff] %vm667, 0.0
        $region104: #{tpu_custom_call.1} parent=75 // pred_fallthru
          _
        %v2504 = vld [vmem:[#allocation2] sm:$0xff]
        %v2505 = vld [vmem:[#allocation2 + $0x8] sm:$0xff]
        %v2506 = vpack.c.bf16 %v2505, %v2504
        %v2507 = vld [vmem:[#allocation12] sm:$0xf]
        %v2508 = vld [vmem:[#allocation12 + $0x4] sm:$0xf]
        %v2509 = vld [vmem:[#allocation12 + $0x8] sm:$0xf]
        %v2510 = vld [vmem:[#allocation12 + $0xc] sm:$0xf]
        %v2511 = vld [vmem:[#allocation13] sm:$0x1]
        %v2513 = vlaneseq
        %v2514 = vshrl.u32 %v2513, 7
        %v2515 = vsub.s32 0, %v2514
        %v2516 = vrot.slane %v2511, %v2515
        %v2522 = vunpack.c.l.b16 %v2507
        %v2523 = vunpack.c.l.b16 %v2508
        %v2524 = vunpack.c.l.b16 %v2509
        %v2525 = vunpack.c.l.b16 %v2510
        %v2526 = vpack.c.b16 %v2523, %v2522
        %v2527 = vpack.c.b16 %v2525, %v2524
        %vm2530 = vcmask 261120
        %v2532 = vsel %vm2530, %v2506, 0
        %2534 = vmatprep.subr.bf16.mxu0 0
        %2535 = vmatpush1.bf16.msra.mxu0 0
        %2536 = vmatprep.subr.bf16.mxu0 0
        %2537 = vmatpush1.bf16.msra.mxu0 0
        %2538 = vmatprep.subr.bf16.mxu0 0
        %2539 = vmatpush1.bf16.msra.mxu0 0
        %2540 = vmatprep.subr.bf16.mxu0 0
        %2541 = vmatpush1.bf16.msra.mxu0 0
        %2542 = vmatprep.subr.bf16.mxu0 0
        %2543 = vmatpush1.bf16.msra.mxu0 0
        %2544 = vmatprep.subr.bf16.mxu0 0
        %2545 = vmatpush1.bf16.msra.mxu0 0
        %2546 = vmatprep.subr.bf16.mxu0 0
        %2547 = vmatpush1.bf16.msra.mxu0 %v2527
        %2548 = vmatprep.subr.bf16.mxu0 0
        %2549 = vmatpush1.bf16.msra.mxu0 %v2526
        %2550 = vmatprep.subr.bf16.mxu0 0
        %2551 = vmatpush2.bf16.msra.mxu0 0
        %2552 = vmatprep.subr.bf16.mxu0 0
        %2553 = vmatpush2.bf16.msra.mxu0 0
        %2554 = vmatprep.subr.bf16.mxu0 0
        %2555 = vmatpush2.bf16.msra.mxu0 0
        %2556 = vmatprep.subr.bf16.mxu0 0
        %2557 = vmatpush2.bf16.msra.mxu0 0
        %2558 = vmatprep.subr.bf16.mxu0 0
        %2559 = vmatpush2.bf16.msra.mxu0 0
        %2560 = vmatprep.subr.bf16.mxu0 0
        %2561 = vmatpush2.bf16.msra.mxu0 0
        %2562 = vmatprep.subr.bf16.mxu0 0
        %2563 = vmatpush2.bf16.msra.mxu0 0
        %2564 = vmatprep.subr.bf16.mxu0 0
        %2565 = vmatpush2.bf16.msra.mxu0 0
        %2566 = vmatprep.mubr.bf16.mxu0 0
        %2567 = vmatmul.mubr.bf16.gmra.mxu0 %v2532
        %v2568 = vpop.f32.mrf.mxu0
        %v2569 = vadd.f32 %v2516, %v2568
        %v2570 = vpop.f32.mrf.mxu0
        %v2571 = vpop.f32.mrf.mxu0
        %v2572 = vadd.f32 %v2516, %v2571
        %v2573 = vpop.f32.mrf.mxu0
        %2574 = vdwg.mxu0
        %v2575 = vmul.f32 %v2569, 0.5
        %v2576 = vmul.f32 %v2572, 0.5
        %v2577 = vmul.f32 %v2569, 0.70710677
        %v2578 = vmul.f32 %v2572, 0.70710677
        %v2579 = verf.f32.pop %v2577
        %v2580 = verf.f32.pop %v2578
        %v2581 = vadd.f32 %v2579, 1.0
        %v2582 = vadd.f32 %v2580, 1.0
        %v2583 = vmul.f32 %v2575, %v2581
        %v2584 = vmul.f32 %v2576, %v2582
        %v2585 = vld [vmem:[#allocation3] sm:$0xff]
        %v2586 = vld [vmem:[#allocation3 + $0x8] sm:$0xff]
        %v2587 = vpack.c.bf16 %v2584, %v2583
        %v2588 = vld [vmem:[%s633] sm:$0xf]
        %v2589 = vld [vmem:[%s633 + $0x4] sm:$0xf]
        %v2590 = vld [vmem:[%s633 + $0x8] sm:$0xf]
        %v2591 = vld [vmem:[%s633 + $0xc] sm:$0xf]
        %v2592 = vld [vmem:[%s633 + $0x10] sm:$0xf]
        %v2593 = vld [vmem:[%s633 + $0x14] sm:$0xf]
        %v2594 = vld [vmem:[%s633 + $0x18] sm:$0xf]
        %v2595 = vld [vmem:[%s633 + $0x1c] sm:$0xf]
        %v2604 = vunpack.c.l.b16 %v2588
        %v2605 = vunpack.c.l.b16 %v2589
        %v2606 = vunpack.c.l.b16 %v2590
        %v2607 = vunpack.c.l.b16 %v2591
        %v2608 = vunpack.c.l.b16 %v2592
        %v2609 = vunpack.c.l.b16 %v2593
        %v2610 = vunpack.c.l.b16 %v2594
        %v2611 = vunpack.c.l.b16 %v2595
        %v2612 = vpack.c.b16 %v2605, %v2604
        %v2613 = vpack.c.b16 %v2607, %v2606
        %v2614 = vpack.c.b16 %v2609, %v2608
        %v2615 = vpack.c.b16 %v2611, %v2610
        %vm2620 = vcmask 523264
        %v2622 = vsel %vm2620, %v2587, 0
        %2624 = vmatprep.subr.bf16.mxu0 0
        %2625 = vmatpush1.bf16.msra.mxu0 0
        %2626 = vmatprep.subr.bf16.mxu0 0
        %2627 = vmatpush1.bf16.msra.mxu0 0
        %2628 = vmatprep.subr.bf16.mxu0 0
        %2629 = vmatpush1.bf16.msra.mxu0 0
        %2630 = vmatprep.subr.bf16.mxu0 0
        %2631 = vmatpush1.bf16.msra.mxu0 0
        %2632 = vmatprep.subr.bf16.mxu0 0
        %2633 = vmatpush1.bf16.msra.mxu0 %v2615
        %2634 = vmatprep.subr.bf16.mxu0 0
        %2635 = vmatpush1.bf16.msra.mxu0 %v2614
        %2636 = vmatprep.subr.bf16.mxu0 0
        %2637 = vmatpush1.bf16.msra.mxu0 %v2613
        %2638 = vmatprep.subr.bf16.mxu0 0
        %2639 = vmatpush1.bf16.msra.mxu0 %v2612
        %2640 = vmatprep.subr.bf16.mxu0 0
        %2641 = vmatpush2.bf16.msra.mxu0 0
        %2642 = vmatprep.subr.bf16.mxu0 0
        %2643 = vmatpush2.bf16.msra.mxu0 0
        %2644 = vmatprep.subr.bf16.mxu0 0
        %2645 = vmatpush2.bf16.msra.mxu0 0
        %2646 = vmatprep.subr.bf16.mxu0 0
        %2647 = vmatpush2.bf16.msra.mxu0 0
        %2648 = vmatprep.subr.bf16.mxu0 0
        %2649 = vmatpush2.bf16.msra.mxu0 0
        %2650 = vmatprep.subr.bf16.mxu0 0
        %2651 = vmatpush2.bf16.msra.mxu0 0
        %2652 = vmatprep.subr.bf16.mxu0 0
        %2653 = vmatpush2.bf16.msra.mxu0 0
        %2654 = vmatprep.subr.bf16.mxu0 0
        %2655 = vmatpush2.bf16.msra.mxu0 0
        %2656 = vmatprep.mubr.bf16.mxu0 0
        %2657 = vmatmul.mubr.bf16.gmra.mxu0 %v2622
        %v2658 = vpop.f32.mrf.mxu0
        %v2659 = vadd.f32 0.0, %v2658
        %v2660 = vpop.f32.mrf.mxu0
        %v2661 = vpop.f32.mrf.mxu0
        %v2662 = vadd.f32 0.0, %v2661
        %v2663 = vpop.f32.mrf.mxu0
        %2664 = vdwg.mxu0
        %v2665 = vadd.f32 %v2585, %v2659
        %v2666 = vadd.f32 %v2586, %v2662
        %2667 = vst.msk [vmem:[#allocation3] sm:$0xff] %vm2530, %v2665
        %2668 = vst.msk [vmem:[#allocation3 + $0x8] sm:$0xff] %vm2530, %v2666
        // Predicated region
        $region105: #{tpu_custom_call.1} parent=75 // pred_check
          %p2669 = pneg %p637
        $region106: #{tpu_custom_call.1} parent=75 // pred_check_branch
          %2671 = sbr.rel (%p2669) target = $region108
        $region107: #{tpu_custom_call.1} parent=75 // pred_region
          %v2672 = vld [vmem:[#allocation3] sm:$0xff]
          %v2673 = vld [vmem:[#allocation3 + $0x8] sm:$0xff]
          %v2674 = vld [vmem:[%s11] sm:$0x1]
          %v2676 = vlaneseq
          %v2677 = vshrl.u32 %v2676, 7
          %v2678 = vsub.s32 0, %v2677
          %v2679 = vrot.slane %v2674, %v2678
          %v2681 = vadd.f32 %v2672, %v2679
          %v2682 = vadd.f32 %v2673, %v2679
          %v2683 = vld [vmem:[#allocation2] sm:$0xff]
          %v2684 = vld [vmem:[#allocation2 + $0x8] sm:$0xff]
          %v2685 = vadd.f32 %v2681, %v2683
          %v2686 = vadd.f32 %v2682, %v2684
          %v2687 = vld [vmem:[%s12] sm:$0x1]
          %v2688 = vld [vmem:[%s13] sm:$0x1]
          %v2689 = vsel %vm2530, %v2685, 0.0
          %2690 = vadd.xlane.f32.xlu0 %v2689
          %v2691 = vpop.xlane.xlu0 %2690
          %v2692 = vsel %vm2530, %v2686, 0.0
          %2693 = vadd.xlane.f32.xlu0 %v2692
          %v2694 = vpop.xlane.xlu0 %2693
          %v2695 = vrcp.pop 32.0
          %v2696 = vmul.f32 %v2691, %v2695
          %v2697 = vmul.f32 %v2694, %v2695
          %v2698 = vsub.f32 %v2685, %v2696
          %v2699 = vsub.f32 %v2686, %v2697
          %v2700 = vmul.f32 %v2698, %v2698
          %v2701 = vmul.f32 %v2699, %v2699
          %v2702 = vsel %vm2530, %v2700, 0.0
          %2703 = vadd.xlane.f32.xlu0 %v2702
          %v2704 = vpop.xlane.xlu0 %2703
          %v2705 = vsel %vm2530, %v2701, 0.0
          %2706 = vadd.xlane.f32.xlu0 %v2705
          %v2707 = vpop.xlane.xlu0 %2706
          %v2708 = vmul.f32 %v2704, %v2695
          %v2709 = vmul.f32 %v2707, %v2695
          %v2710 = vadd.f32 %v2708, 1e-12
          %v2711 = vadd.f32 %v2709, 1e-12
          %v2712 = vrsqrt.pop %v2710
          %v2713 = vrsqrt.pop %v2711
          %v2714 = vmul.f32 %v2698, %v2712
          %v2715 = vmul.f32 %v2699, %v2713
          %v2717 = vlaneseq
          %v2718 = vshrl.u32 %v2717, 7
          %v2719 = vsub.s32 0, %v2718
          %v2720 = vrot.slane %v2687, %v2719
          %v2722 = vmul.f32 %v2714, %v2720
          %v2723 = vmul.f32 %v2715, %v2720
          %v2725 = vlaneseq
          %v2726 = vshrl.u32 %v2725, 7
          %v2727 = vsub.s32 0, %v2726
          %v2728 = vrot.slane %v2688, %v2727
          %v2730 = vadd.f32 %v2722, %v2728
          %v2731 = vadd.f32 %v2723, %v2728
          %2732 = vst.msk [vmem:[%s622] sm:$0xff] %vm2530, %v2730
          %2733 = vst.msk [vmem:[%s622 + $0x8] sm:$0xff] %vm2530, %v2731
        $region108: #{tpu_custom_call.1} parent=75 // pred_fallthru
          _
        %s2734 = sand.u32 %s384, 1
        %s2735 = scalar_lea.sflag [#allocation6], %s2734
        %s2736 = sand.u32 %s384, 1
        %s2737 = smul.addr %s2736, 16
        %s2738 = scalar_lea.vmem [#allocation15], %s2737
        // Predicated region
        $region109: #{tpu_custom_call.1} parent=75 // pred_check
          %p2739 = pneg %p394
        $region110: #{tpu_custom_call.1} parent=75 // pred_check_branch
          %2741 = sbr.rel (%p2739) target = $region112
        $region111: #{tpu_custom_call.1} parent=75 // pred_region
          %s2742 = smul.u32 2, %s40
          %s2744 = ssub.s32 256, 256
          %2745 = vsyncadd %s2735, %s2744
          %s2746 = smul.addr %s39, 2
          %s2747 = sadd.s32 %s2742, %s2746
          %s2748 = smul.addr %s2747, 128
          %s2749 = scalar_lea.hbm %s14, %s2748
          %s2750 = sshll.u32 %s2738, 4
          %s2751 = int_to_ptr.vmem [resolvable:$true] %s2750
          %2756 = dma.vmem_to_hbm [thread:$0]  %s2751, 256, %s2749, %s2735, 128, 128, 8
        $region112: #{tpu_custom_call.1} parent=75 // pred_fallthru
          _
      $region76: #{tpu_custom_call.1} parent=5 // pred_fallthru
        _
      %p2757 = scmp.le.s32.totalorder 2, %s29
      // Predicated region
      $region113: #{tpu_custom_call.1} parent=5 // pred_check
        %p2758 = pneg %p2757
      $region114: #{tpu_custom_call.1} parent=5 // pred_check_branch
        %2760 = sbr.rel (%p2758) target = $region116
      $region115: #{tpu_custom_call.1} parent=5 // pred_region
        %s2761 = ssub.s32 %s29, 2
        // Predicated region
        $region117: #{tpu_custom_call.1} parent=115 // pred_check
          %p2762 = pneg %p400
        $region118: #{tpu_custom_call.1} parent=115 // pred_check_branch
          %2764 = sbr.rel (%p2762) target = $region120
        $region119: #{tpu_custom_call.1} parent=115 // pred_region
          %s2765 = sand.u32 %s385, 1
          %s2766 = scalar_lea.sflag [#allocation6], %s2765
          %s2767 = sand.u32 %s385, 1
          %s2768 = smul.addr %s2767, 16
          %s2769 = scalar_lea.vmem [#allocation15], %s2768
          %2770 = dma.done %s2766, 256
        $region120: #{tpu_custom_call.1} parent=115 // pred_fallthru
          _
      $region116: #{tpu_custom_call.1} parent=5 // pred_fallthru
        _
    $region6: #{tpu_custom_call.1} parent=1 // loop_footer
      %s33 = sadd.s32 1, %s29
    $region7: #{tpu_custom_call.1} parent=1 // loop_footer_branch
      %28 = sbr.rel target = $region3
    $region8: #{tpu_custom_call.1} parent=1 // loop_exit
      _
    %2771 = vsyncpa [#allocation5], 1
    %s2772 = scalar_lea.sflag [#allocation5], 1
    %2773 = vsyncpa %s2772, 1
    %2774 = vsyncpa [#allocation8], 1
    %2775 = vsyncpa [#allocation11], 1
    %2776 = vsyncpa [#allocation14], 1
    %2777 = vsyncpa [#allocation6], 1
    %s2778 = scalar_lea.sflag [#allocation6], 1
    %2779 = vsyncpa %s2778, 1

</llo_original>
